<compile_context>
chip_gen: v7x
topology: tpu7x:2x2x1
jax: 0.10.0
libtpu: 0.0.40
codegen_flags: <defaults>
</compile_context>

<pallas_src>
import functools

import jax
import jax.numpy as jnp
from jax import lax
from jax.experimental import pallas as pl
from jax.experimental.pallas import tpu as pltpu


_NT = (((1,), (1,)), ((), ()))      # contract last dim of both operands (A @ B^T)


def _mha_kernel(xq_ref, xkv_ref, wq_ref, wk_ref, wv_ref, wo_ref, o_ref,
                k_cache, v_cache, attn_buf, *, num_heads, head_dim, scale):
    """One (batch, query-tile) grid step.

    xq_ref  : (1, TQ, D)   query activations (compute dtype)
    xkv_ref : (1, S_k, D)  key/value activations (compute dtype)
    w*_ref  : (D, D)       projection weights, nn.Linear (out, in) layout, grid-invariant
    o_ref   : (1, TQ, D)   output tile
    k_cache, v_cache : (S_k, D) VMEM — projected K/V, cached across query tiles
    attn_buf: (TQ, D) VMEM — concatenated per-head PV outputs (pre out-projection)
    """
    qi = pl.program_id(1)
    mx = k_cache.dtype

    # Project K/V once per batch element; reuse across all query tiles of this batch.
    @pl.when(qi == 0)
    def _fill_kv():
        x_kv = xkv_ref[0]                                                     # (S_k, D)
        k_cache[...] = lax.dot_general(
            x_kv, wk_ref[...], _NT, preferred_element_type=jnp.float32).astype(mx)
        v_cache[...] = lax.dot_general(
            x_kv, wv_ref[...], _NT, preferred_element_type=jnp.float32).astype(mx)

    # Full-width Q projection (MXU-dense even when head_dim < 128) + softmax scale.
    q_full = lax.dot_general(
        xq_ref[0], wq_ref[...], _NT, preferred_element_type=jnp.float32) * scale  # (TQ, D)

    # Per-head scores / softmax / PV; each head fills its column slot of attn_buf.
    for h in range(num_heads):
        lo, hi = h * head_dim, (h + 1) * head_dim
        q_h = q_full[:, lo:hi].astype(mx)                                     # (TQ, hd)
        k_h = k_cache[:, lo:hi]                                               # (S_k, hd)
        v_h = v_cache[:, lo:hi]                                               # (S_k, hd)

        s = lax.dot_general(q_h, k_h, _NT,
                            preferred_element_type=jnp.float32)              # (TQ, S_k)
        s_max = jnp.max(s, axis=-1, keepdims=True)
        p = jnp.exp(s - s_max)
        p = p * pl.reciprocal(jnp.sum(p, axis=-1, keepdims=True), approx=True)

        attn_buf[:, lo:hi] = jnp.dot(
            p.astype(mx), v_h, preferred_element_type=jnp.float32).astype(mx)

    # Single deferred out-projection: contraction K = D (NT against the (out,in) weight).
    o_ref[0] = lax.dot_general(
        attn_buf[...], wo_ref[...], _NT,
        preferred_element_type=jnp.float32).astype(o_ref.dtype)


def _round_up(x, m):
    return ((x + m - 1) // m) * m


def _pick_query_tile(s_q, tq_max):
    """Largest multiple-of-8 tile <= tq_max that evenly divides the 8-padded query length."""
    tq_max = max(8, (tq_max // 8) * 8)
    s_pad = _round_up(s_q, 8)
    if s_pad <= tq_max:
        return s_pad
    best = 8
    for cand in range(8, tq_max + 1, 8):
        if s_pad % cand == 0:
            best = cand
    return best


def multihead_attention_no_flash(query, key_value, wq, wk, wv, wo, *,
                                 num_heads, tq=256, compute_dtype=None):
    """MultiheadAttentionNoFlash forward.

    query:       (B, S_q, D)
    key_value:   (B, S_k, D)   (the module always uses key == value)
    wq/wk/wv/wo: (D, D) nn.Linear (out_features, in_features) layout, no bias.
    compute_dtype: dtype for MXU operands (e.g. jnp.bfloat16 on v6e/v7x); softmax and
                   accumulation always stay in f32.
    """
    B, S_q, D = query.shape
    Bk, S_k, Dk = key_value.shape
    assert B == Bk and D == Dk, "query / key_value shape mismatch"
    assert D % num_heads == 0, "dim must be divisible by num_heads"
    hd = D // num_heads
    assert hd % 8 == 0, "head_dim must be a multiple of 8 (TPU sublane tiling)"
    scale = float(hd) ** -0.5

    out_dtype = query.dtype
    mx = jnp.dtype(compute_dtype) if compute_dtype is not None else jnp.dtype(query.dtype)

    # No transposes, no weight scaling here: all matmuls are NT contractions against the
    # native (out, in) layout and the softmax scale is applied in-kernel.
    q_in = query.astype(mx)
    kv_in = key_value.astype(mx)
    wq_c, wk_c, wv_c, wo_c = (w.astype(mx) for w in (wq, wk, wv, wo))

    tq = _pick_query_tile(S_q, tq)
    s_q_pad = _round_up(S_q, tq)
    if s_q_pad != S_q:
        q_in = jnp.pad(q_in, ((0, 0), (0, s_q_pad - S_q), (0, 0)))
    n_q = s_q_pad // tq
    grid = (B, n_q)

    # Generation-aware VMEM budget: pipeline double-buffers + resident weights + scratch,
    # capped at ~80% of physical VMEM (headroom for Mosaic internal scratch/semaphores).
    isz = jnp.dtype(mx).itemsize
    osz = jnp.dtype(out_dtype).itemsize
    work = (2 * tq * D * isz            # query tile (double buffered)
            + 2 * S_k * D * isz         # K/V activation tile (double buffered)
            + 2 * 4 * D * D * isz       # resident weights (conservatively x2)
            + 2 * tq * D * osz          # output tile (double buffered)
            + 2 * S_k * D * isz         # K/V caches
            + tq * D * isz)             # attn scratch
    try:
        cap = int(pltpu.get_tpu_info().vmem_capacity_bytes)
    except Exception:
        cap = 64 << 20                  # v7x per-core size as a conservative fallback
    vmem_limit = int(min(max(32 << 20, work + (8 << 20)), int(cap * 0.8)))

    cost = pl.CostEstimate(
        flops=int(2 * B * (s_q_pad * D * D          # Q projection
                           + 2 * S_k * D * D        # K/V projections (once per batch)
                           + 2 * s_q_pad * S_k * D  # scores + PV
                           + s_q_pad * D * D)),     # output projection
        transcendentals=int(B * num_heads * s_q_pad * S_k),
        bytes_accessed=int((B * (s_q_pad + S_k) * D + 4 * D * D) * isz
                           + B * s_q_pad * D * osz),
    )

    w_spec = pl.BlockSpec((D, D), lambda b, qi: (0, 0))   # grid-invariant -> DMA'd once
    kernel = functools.partial(_mha_kernel, num_heads=num_heads, head_dim=hd, scale=scale)

    out = pl.pallas_call(
        kernel,
        out_shape=jax.ShapeDtypeStruct((B, s_q_pad, D), out_dtype),
        grid_spec=pltpu.PrefetchScalarGridSpec(
            num_scalar_prefetch=0,
            grid=grid,
            in_specs=[
                pl.BlockSpec((1, tq, D), lambda b, qi: (b, qi, 0)),    # query tile
                pl.BlockSpec((1, S_k, D), lambda b, qi: (b, 0, 0)),    # full K/V activations
                w_spec, w_spec, w_spec, w_spec,                        # resident weights
            ],
            out_specs=pl.BlockSpec((1, tq, D), lambda b, qi: (b, qi, 0)),
            scratch_shapes=[
                pltpu.VMEM((S_k, D), mx),   # k_cache
                pltpu.VMEM((S_k, D), mx),   # v_cache
                pltpu.VMEM((tq, D), mx),    # attn_buf (pre out-projection)
            ],
        ),
        compiler_params=pltpu.CompilerParams(
            dimension_semantics=("parallel", "arbitrary"),
            vmem_limit_bytes=vmem_limit,
        ),
        cost_estimate=cost,
    )(q_in, kv_in, wq_c, wk_c, wv_c, wo_c)

    if s_q_pad != S_q:
        out = out[:, :S_q, :]
    return out


def _reference(query, key_value, wq, wk, wv, wo, num_heads):
    """Pure-JAX reference mirroring the PyTorch module exactly."""
    B, S_q, D = query.shape
    _, S_k, _ = key_value.shape
    hd = D // num_heads
    scale = float(hd) ** -0.5
    q = query @ wq.T
    k = key_value @ wk.T
    v = key_value @ wv.T
    q = q.reshape(B, S_q, num_heads, hd).transpose(0, 2, 1, 3)
    k = k.reshape(B, S_k, num_heads, hd).transpose(0, 2, 1, 3)
    v = v.reshape(B, S_k, num_heads, hd).transpose(0, 2, 1, 3)
    s = jnp.einsum("bhqd,bhkd->bhqk", q, k) * scale
    p = jax.nn.softmax(s, axis=-1)
    o = jnp.einsum("bhqk,bhkd->bhqd", p, v)
    o = o.transpose(0, 2, 1, 3).reshape(B, S_q, D)
    return o @ wo.T


if __name__ == "__main__":
    # Small but lane-friendly shapes: head_dim = 256 / 2 = 128.
    B, S, D, H = 2, 16, 256, 2

    key = jax.random.PRNGKey(0)
    kx, kq2, kq3, kwq, kwk, kwv, kwo = jax.random.split(key, 7)

    x = jax.random.normal(kx, (B, S, D), dtype=jnp.float32)
    bound = 1.0 / (D ** 0.5)
    wq = jax.random.uniform(kwq, (D, D), jnp.float32, -bound, bound)
    wk = jax.random.uniform(kwk, (D, D), jnp.float32, -bound, bound)
    wv = jax.random.uniform(kwv, (D, D), jnp.float32, -bound, bound)
    wo = jax.random.uniform(kwo, (D, D), jnp.float32, -bound, bound)

    # 1) Self-attention (tag_attention: query == key == value), tiled queries (n_q = 2)
    #    exercising the K/V-cache reuse across query tiles.
    out = multihead_attention_no_flash(x, x, wq, wk, wv, wo, num_heads=H, tq=8)
    out = jax.block_until_ready(out)
    ref = _reference(x, x, wq, wk, wv, wo, H)
    assert out.shape == (B, S, D)
    assert jnp.allclose(out, ref, atol=5e-3, rtol=5e-3), "self-attention mismatch"

    # 2) Cross-attention (cross_attention: query != key == value, S_q != S_k).
    q2 = jax.random.normal(kq2, (B, 8, D), dtype=jnp.float32)
    out_x = multihead_attention_no_flash(q2, x, wq, wk, wv, wo, num_heads=H, tq=8)
    out_x = jax.block_until_ready(out_x)
    ref_x = _reference(q2, x, wq, wk, wv, wo, H)
    assert jnp.allclose(out_x, ref_x, atol=5e-3, rtol=5e-3), "cross-attention mismatch"

    # 3) Ragged query length (S_q = 12 -> padded to 16, tq = 8) exercising the pad/slice path.
    q3 = jax.random.normal(kq3, (B, 12, D), dtype=jnp.float32)
    out_r = multihead_attention_no_flash(q3, x, wq, wk, wv, wo, num_heads=H, tq=8)
    out_r = jax.block_until_ready(out_r)
    ref_r = _reference(q3, x, wq, wk, wv, wo, H)
    assert out_r.shape == (B, 12, D)
    assert jnp.allclose(out_r, ref_r, atol=5e-3, rtol=5e-3), "padded-query mismatch"

    # 4) bf16 MXU-operand fast path (v6e/v7x), f32 softmax + accumulation.
    out_bf = multihead_attention_no_flash(x, x, wq, wk, wv, wo, num_heads=H, tq=8,
                                          compute_dtype=jnp.bfloat16)
    out_bf = jax.block_until_ready(out_bf)
    assert jnp.allclose(out_bf.astype(jnp.float32), ref, atol=6e-2, rtol=6e-2), \
        "bf16 path mismatch"

    print("KERNEL_OK")
</pallas_src>

<mosaic_0001>
module attributes {stable_mosaic.version = 11 : i64} {
  func.func @_mha_kernel(%arg0: i32, %arg1: i32, %arg2: memref<1x8x256xf32, #tpu.memory_space<vmem>>, %arg3: memref<1x16x256xf32, #tpu.memory_space<vmem>>, %arg4: memref<256x256xf32, #tpu.memory_space<vmem>>, %arg5: memref<256x256xf32, #tpu.memory_space<vmem>>, %arg6: memref<256x256xf32, #tpu.memory_space<vmem>>, %arg7: memref<256x256xf32, #tpu.memory_space<vmem>>, %arg8: memref<1x8x256xf32, #tpu.memory_space<vmem>>, %arg9: memref<16x256xf32, #tpu.memory_space<vmem>>, %arg10: memref<16x256xf32, #tpu.memory_space<vmem>>, %arg11: memref<8x256xf32, #tpu.memory_space<vmem>>) attributes {dimension_semantics = [#tpu.dimension_semantics<parallel>, #tpu.dimension_semantics<arbitrary>], iteration_bounds = array<i64: 2, 2>, scalar_prefetch = 0 : i64, scratch_operands = 3 : i64, tpu.core_type = #tpu.core_type<tc>, window_params = [{transform_indices = @transform_0, window_bounds = array<i64: 1, 8, 256>}, {transform_indices = @transform_1, window_bounds = array<i64: 1, 16, 256>}, {pipeline_mode = #tpu.pipeline_mode<synchronous>, transform_indices = @transform_2, window_bounds = array<i64: 256, 256>}, {pipeline_mode = #tpu.pipeline_mode<synchronous>, transform_indices = @transform_3, window_bounds = array<i64: 256, 256>}, {pipeline_mode = #tpu.pipeline_mode<synchronous>, transform_indices = @transform_4, window_bounds = array<i64: 256, 256>}, {pipeline_mode = #tpu.pipeline_mode<synchronous>, transform_indices = @transform_5, window_bounds = array<i64: 256, 256>}, {transform_indices = @transform_6, window_bounds = array<i64: 1, 8, 256>}]} {
    %c0_i32 = arith.constant 0 : i32
    %0 = arith.cmpi eq, %arg1, %c0_i32 : i32
    %1 = arith.extui %0 : i1 to i32
    %c0_i32_0 = arith.constant 0 : i32
    %2 = arith.cmpi ne, %1, %c0_i32_0 : i32
    scf.if %2 {
      %c0_33 = arith.constant 0 : index
      %c0_34 = arith.constant 0 : index
      %c0_35 = arith.constant 0 : index
      %47 = vector.load %arg3[%c0_33, %c0_34, %c0_35] : memref<1x16x256xf32, #tpu.memory_space<vmem>>, vector<1x16x256xf32>
      %48 = vector.shape_cast %47 : vector<1x16x256xf32> to vector<16x256xf32>
      %c0_36 = arith.constant 0 : index
      %c0_37 = arith.constant 0 : index
      %49 = vector.load %arg5[%c0_36, %c0_37] : memref<256x256xf32, #tpu.memory_space<vmem>>, vector<256x256xf32>
      %cst_38 = arith.constant dense<0.000000e+00> : vector<16x256xf32>
      %50 = tpu.matmul %48, %49, %cst_38 {dimension_numbers = #tpu.dot_dimension_numbers<[1], [1], [0], [0], [0, 0, 1, 0], [], []>} : vector<16x256xf32>, vector<256x256xf32>, vector<16x256xf32> -> vector<16x256xf32>
      %c0_39 = arith.constant 0 : index
      %c0_40 = arith.constant 0 : index
      %51 = vector.load %arg9[%c0_39, %c0_40] : memref<16x256xf32, #tpu.memory_space<vmem>>, vector<16x256xf32>
      tpu.vector_store %arg9[%c0_39, %c0_40], %50 {strides = array<i32>} : memref<16x256xf32, #tpu.memory_space<vmem>>, vector<16x256xf32>,
      %c0_41 = arith.constant 0 : index
      %c0_42 = arith.constant 0 : index
      %52 = vector.load %arg6[%c0_41, %c0_42] : memref<256x256xf32, #tpu.memory_space<vmem>>, vector<256x256xf32>
      %cst_43 = arith.constant dense<0.000000e+00> : vector<16x256xf32>
      %53 = tpu.matmul %48, %52, %cst_43 {dimension_numbers = #tpu.dot_dimension_numbers<[1], [1], [0], [0], [0, 0, 1, 0], [], []>} : vector<16x256xf32>, vector<256x256xf32>, vector<16x256xf32> -> vector<16x256xf32>
      %c0_44 = arith.constant 0 : index
      %c0_45 = arith.constant 0 : index
      %54 = vector.load %arg10[%c0_44, %c0_45] : memref<16x256xf32, #tpu.memory_space<vmem>>, vector<16x256xf32>
      tpu.vector_store %arg10[%c0_44, %c0_45], %53 {strides = array<i32>} : memref<16x256xf32, #tpu.memory_space<vmem>>, vector<16x256xf32>,
    } else {
    }
    %c0 = arith.constant 0 : index
    %c0_1 = arith.constant 0 : index
    %c0_2 = arith.constant 0 : index
    %3 = vector.load %arg2[%c0, %c0_1, %c0_2] : memref<1x8x256xf32, #tpu.memory_space<vmem>>, vector<1x8x256xf32>
    %4 = vector.shape_cast %3 : vector<1x8x256xf32> to vector<8x256xf32>
    %c0_3 = arith.constant 0 : index
    %c0_4 = arith.constant 0 : index
    %5 = vector.load %arg4[%c0_3, %c0_4] : memref<256x256xf32, #tpu.memory_space<vmem>>, vector<256x256xf32>
    %cst = arith.constant dense<0.000000e+00> : vector<8x256xf32>
    %6 = tpu.matmul %4, %5, %cst {dimension_numbers = #tpu.dot_dimension_numbers<[1], [1], [0], [0], [0, 0, 1, 0], [], []>} : vector<8x256xf32>, vector<256x256xf32>, vector<8x256xf32> -> vector<8x256xf32>
    %cst_5 = arith.constant 0.0883883461 : f32
    %7 = vector.broadcast %cst_5 : f32 to vector<8x256xf32>
    %8 = arith.mulf %6, %7 : vector<8x256xf32>
    %9 = vector.extract_strided_slice %8 {offsets = [0, 0], sizes = [8, 128], strides = [1, 1]} : vector<8x256xf32> to vector<8x128xf32>
    %c0_6 = arith.constant 0 : index
    %c0_7 = arith.constant 0 : index
    %10 = vector.load %arg9[%c0_6, %c0_7] : memref<16x256xf32, #tpu.memory_space<vmem>>, vector<16x128xf32>
    %c0_8 = arith.constant 0 : index
    %c0_9 = arith.constant 0 : index
    %11 = vector.load %arg10[%c0_8, %c0_9] : memref<16x256xf32, #tpu.memory_space<vmem>>, vector<16x128xf32>
    %cst_10 = arith.constant dense<0.000000e+00> : vector<8x16xf32>
    %12 = tpu.matmul %9, %10, %cst_10 {dimension_numbers = #tpu.dot_dimension_numbers<[1], [1], [0], [0], [0, 0, 1, 0], [], []>} : vector<8x128xf32>, vector<16x128xf32>, vector<8x16xf32> -> vector<8x16xf32>
    %cst_11 = arith.constant dense<0xFF800000> : vector<8xf32>
    %13 = vector.multi_reduction <maximumf>, %12, %cst_11 [1] : vector<8x16xf32> to vector<8xf32>
    %14 = vector.shape_cast %13 : vector<8xf32> to vector<8x1xf32>
    %15 = vector.broadcast %14 : vector<8x1xf32> to vector<8x16xf32>
    %16 = arith.subf %12, %15 : vector<8x16xf32>
    %17 = math.exp %16 : vector<8x16xf32>
    %cst_12 = arith.constant dense<0.000000e+00> : vector<8xf32>
    %18 = vector.multi_reduction <add>, %17, %cst_12 [1] : vector<8x16xf32> to vector<8xf32>
    %19 = vector.shape_cast %18 : vector<8xf32> to vector<8x1xf32>
    %20 = tpu.reciprocal %19 {approx = true} : vector<8x1xf32> -> vector<8x1xf32>
    %21 = vector.broadcast %20 : vector<8x1xf32> to vector<8x16xf32>
    %22 = arith.mulf %17, %21 : vector<8x16xf32>
    %cst_13 = arith.constant dense<0.000000e+00> : vector<8x128xf32>
    %23 = tpu.matmul %22, %11, %cst_13 {dimension_numbers = #tpu.dot_dimension_numbers<[1], [0], [0], [1], [0, 0, 1, 1], [], []>} : vector<8x16xf32>, vector<16x128xf32>, vector<8x128xf32> -> vector<8x128xf32>
    %c0_14 = arith.constant 0 : index
    %c0_15 = arith.constant 0 : index
    %24 = vector.load %arg11[%c0_14, %c0_15] : memref<8x256xf32, #tpu.memory_space<vmem>>, vector<8x128xf32>
    tpu.vector_store %arg11[%c0_14, %c0_15], %23 {strides = array<i32>} : memref<8x256xf32, #tpu.memory_space<vmem>>, vector<8x128xf32>,
    %25 = vector.extract_strided_slice %8 {offsets = [0, 128], sizes = [8, 128], strides = [1, 1]} : vector<8x256xf32> to vector<8x128xf32>
    %c0_16 = arith.constant 0 : index
    %c128 = arith.constant 128 : index
    %26 = vector.load %arg9[%c0_16, %c128] : memref<16x256xf32, #tpu.memory_space<vmem>>, vector<16x128xf32>
    %c0_17 = arith.constant 0 : index
    %c128_18 = arith.constant 128 : index
    %27 = vector.load %arg10[%c0_17, %c128_18] : memref<16x256xf32, #tpu.memory_space<vmem>>, vector<16x128xf32>
    %cst_19 = arith.constant dense<0.000000e+00> : vector<8x16xf32>
    %28 = tpu.matmul %25, %26, %cst_19 {dimension_numbers = #tpu.dot_dimension_numbers<[1], [1], [0], [0], [0, 0, 1, 0], [], []>} : vector<8x128xf32>, vector<16x128xf32>, vector<8x16xf32> -> vector<8x16xf32>
    %cst_20 = arith.constant dense<0xFF800000> : vector<8xf32>
    %29 = vector.multi_reduction <maximumf>, %28, %cst_20 [1] : vector<8x16xf32> to vector<8xf32>
    %30 = vector.shape_cast %29 : vector<8xf32> to vector<8x1xf32>
    %31 = vector.broadcast %30 : vector<8x1xf32> to vector<8x16xf32>
    %32 = arith.subf %28, %31 : vector<8x16xf32>
    %33 = math.exp %32 : vector<8x16xf32>
    %cst_21 = arith.constant dense<0.000000e+00> : vector<8xf32>
    %34 = vector.multi_reduction <add>, %33, %cst_21 [1] : vector<8x16xf32> to vector<8xf32>
    %35 = vector.shape_cast %34 : vector<8xf32> to vector<8x1xf32>
    %36 = tpu.reciprocal %35 {approx = true} : vector<8x1xf32> -> vector<8x1xf32>
    %37 = vector.broadcast %36 : vector<8x1xf32> to vector<8x16xf32>
    %38 = arith.mulf %33, %37 : vector<8x16xf32>
    %cst_22 = arith.constant dense<0.000000e+00> : vector<8x128xf32>
    %39 = tpu.matmul %38, %27, %cst_22 {dimension_numbers = #tpu.dot_dimension_numbers<[1], [0], [0], [1], [0, 0, 1, 1], [], []>} : vector<8x16xf32>, vector<16x128xf32>, vector<8x128xf32> -> vector<8x128xf32>
    %c0_23 = arith.constant 0 : index
    %c128_24 = arith.constant 128 : index
    %40 = vector.load %arg11[%c0_23, %c128_24] : memref<8x256xf32, #tpu.memory_space<vmem>>, vector<8x128xf32>
    tpu.vector_store %arg11[%c0_23, %c128_24], %39 {strides = array<i32>} : memref<8x256xf32, #tpu.memory_space<vmem>>, vector<8x128xf32>,
    %c0_25 = arith.constant 0 : index
    %c0_26 = arith.constant 0 : index
    %41 = vector.load %arg11[%c0_25, %c0_26] : memref<8x256xf32, #tpu.memory_space<vmem>>, vector<8x256xf32>
    %c0_27 = arith.constant 0 : index
    %c0_28 = arith.constant 0 : index
    %42 = vector.load %arg7[%c0_27, %c0_28] : memref<256x256xf32, #tpu.memory_space<vmem>>, vector<256x256xf32>
    %cst_29 = arith.constant dense<0.000000e+00> : vector<8x256xf32>
    %43 = tpu.matmul %41, %42, %cst_29 {dimension_numbers = #tpu.dot_dimension_numbers<[1], [1], [0], [0], [0, 0, 1, 0], [], []>} : vector<8x256xf32>, vector<256x256xf32>, vector<8x256xf32> -> vector<8x256xf32>
    %c0_30 = arith.constant 0 : index
    %c0_31 = arith.constant 0 : index
    %c0_32 = arith.constant 0 : index
    %44 = vector.load %arg8[%c0_30, %c0_31, %c0_32] : memref<1x8x256xf32, #tpu.memory_space<vmem>>, vector<1x8x256xf32>
    %45 = vector.shape_cast %44 : vector<1x8x256xf32> to vector<8x256xf32>
    %46 = vector.shape_cast %43 : vector<8x256xf32> to vector<1x8x256xf32>
    tpu.vector_store %arg8[%c0_30, %c0_31, %c0_32], %46 {strides = array<i32>} : memref<1x8x256xf32, #tpu.memory_space<vmem>>, vector<1x8x256xf32>,
    return
  }
  func.func @transform_0(%arg0: i32, %arg1: i32) -> (i32, i32, i32) {
    %c0_i32 = arith.constant 0 : i32
    %c0_i32_0 = arith.constant 0 : i32
    return %arg0, %arg1, %c0_i32 : i32, i32, i32
  }
  func.func @transform_1(%arg0: i32, %arg1: i32) -> (i32, i32, i32) {
    %c0_i32 = arith.constant 0 : i32
    %c0_i32_0 = arith.constant 0 : i32
    %c0_i32_1 = arith.constant 0 : i32
    return %arg0, %c0_i32, %c0_i32_0 : i32, i32, i32
  }
  func.func @transform_2(%arg0: i32, %arg1: i32) -> (i32, i32) {
    %c0_i32 = arith.constant 0 : i32
    %c0_i32_0 = arith.constant 0 : i32
    %c0_i32_1 = arith.constant 0 : i32
    return %c0_i32, %c0_i32_0 : i32, i32
  }
  func.func @transform_3(%arg0: i32, %arg1: i32) -> (i32, i32) {
    %c0_i32 = arith.constant 0 : i32
    %c0_i32_0 = arith.constant 0 : i32
    %c0_i32_1 = arith.constant 0 : i32
    return %c0_i32, %c0_i32_0 : i32, i32
  }
  func.func @transform_4(%arg0: i32, %arg1: i32) -> (i32, i32) {
    %c0_i32 = arith.constant 0 : i32
    %c0_i32_0 = arith.constant 0 : i32
    %c0_i32_1 = arith.constant 0 : i32
    return %c0_i32, %c0_i32_0 : i32, i32
  }
  func.func @transform_5(%arg0: i32, %arg1: i32) -> (i32, i32) {
    %c0_i32 = arith.constant 0 : i32
    %c0_i32_0 = arith.constant 0 : i32
    %c0_i32_1 = arith.constant 0 : i32
    return %c0_i32, %c0_i32_0 : i32, i32
  }
  func.func @transform_6(%arg0: i32, %arg1: i32) -> (i32, i32, i32) {
    %c0_i32 = arith.constant 0 : i32
    %c0_i32_0 = arith.constant 0 : i32
    return %arg0, %arg1, %c0_i32 : i32, i32, i32
  }
}

</mosaic_0001>

<llo_original>
// kernel: tpu_custom_call.1
$region0: #{tpu_custom_call.1}
  #allocation0 [shape = 'u32[]', space=smem, size = 0x4, offset = 0x4, fixed_abs, tag = 'smem constant byte address 0x4 - core index']
  #allocation1 [shape = 'u32[144,128]{1,0:T(1,128)}', space=vmem, size = 0x12000, scoped, tag = 'internal scratch']
  #allocation2 [shape = 'f32[16,256]{1,0:T(8,128)}', space=vmem, size = 0x4000, scoped, tag = 'scratch operand']
  #allocation3 [shape = 'f32[16,256]{1,0:T(8,128)}', space=vmem, size = 0x4000, scoped, tag = 'scratch operand']
  #allocation4 [shape = 'f32[8,256]{1,0:T(8,128)}', space=vmem, size = 0x2000, scoped, tag = 'scratch operand']
  %s0 = inlined_call_operand.hbm [shape: f32[2,16,256], index: 0, kind: input, shape index: {}]
  %s1 = inlined_call_operand.hbm [shape: f32[2,16,256], index: 1, kind: input, shape index: {}]
  %s2 = inlined_call_operand.hbm [shape: f32[256,256], index: 2, kind: input, shape index: {}]
  %s3 = inlined_call_operand.hbm [shape: f32[256,256], index: 3, kind: input, shape index: {}]
  %s4 = inlined_call_operand.hbm [shape: f32[256,256], index: 4, kind: input, shape index: {}]
  %s5 = inlined_call_operand.hbm [shape: f32[256,256], index: 5, kind: input, shape index: {}]
  %s6 = inlined_call_operand.hbm [shape: f32[2,16,256], index: 6, kind: output, shape index: {}]
  %s7 = sld [smem:[#allocation0]]
  $region85: #{tpu_custom_call.1} parent=0
    _
  %s9 = ssub.s32 1, %s7
  %s10 = scalar_select 0, %s9, %s7
  $region1: #{tpu_custom_call.1} parent=0
    #allocation5 [shape = 'u8[16384]{0}', space=vmem, size = 0x4000, scoped, tag = 'input window, operand 0']
    #allocation6 [shape = 's32[2]{0}', space=sflag, size = 0x8, scoped, tag = 'scoped memory for tpu_custom_call.1']
    #allocation7 [shape = 's32[2]{0}', space=sflag, size = 0x8, scoped, tag = 'scoped memory for tpu_custom_call.1']
    #allocation8 [shape = 'u8[32768]{0}', space=vmem, size = 0x8000, scoped, tag = 'input window, operand 1']
    #allocation9 [shape = 's32[2]{0}', space=sflag, size = 0x8, scoped, tag = 'scoped memory for tpu_custom_call.1']
    #allocation10 [shape = 'u8[262144]{0}', space=vmem, size = 0x40000, scoped, tag = 'input window, operand 2, single buffered']
    #allocation11 [shape = 'u8[262144]{0}', space=vmem, size = 0x40000, scoped, tag = 'input window, operand 3, single buffered']
    #allocation12 [shape = 's32[1]{0}', space=sflag, size = 0x4, scoped, tag = 'scoped memory for tpu_custom_call.1']
    #allocation13 [shape = 'u8[262144]{0}', space=vmem, size = 0x40000, scoped, tag = 'input window, operand 4, single buffered']
    #allocation14 [shape = 'u8[262144]{0}', space=vmem, size = 0x40000, scoped, tag = 'input window, operand 5, single buffered']
    #allocation15 [shape = 's32[1]{0}', space=sflag, size = 0x4, scoped, tag = 'scoped memory for tpu_custom_call.1']
    #allocation16 [shape = 'u8[16384]{0}', space=vmem, size = 0x4000, scoped, tag = 'output window, operand 0']
    %11 = vsyncpa [#allocation6], 0
    %s12 = scalar_lea.sflag [#allocation6], 1
    %13 = vsyncpa %s12, 0
    %14 = vsyncpa [#allocation9], 0
    %s15 = scalar_lea.sflag [#allocation9], 1
    %16 = vsyncpa %s15, 0
    %17 = vsyncpa [#allocation12], 0
    %18 = vsyncpa [#allocation15], 0
    %19 = vsyncpa [#allocation7], 0
    %s20 = scalar_lea.sflag [#allocation7], 1
    %21 = vsyncpa %s20, 0
    loop: start=0, step=1, limit=6
    $region2: #{tpu_custom_call.1} parent=1 // loop_pre_header
      _
    $region3: #{tpu_custom_call.1} parent=1 // loop_header
      %s23 = sphi 0, %s27
      %p24 = scmp.ge.s32.totalorder %s23, 6
      %s30 = sphi 0, %s42
      %s31 = sphi 0, %s38
      %s32 = sphi 0, %s30
      %s33 = sphi 0, %s31
      %s34 = sphi 0, %s32
      %s35 = sphi 0, %s33
      %s47 = sphi 0, %s49
      %s50 = sphi 0, %s47
      %s51 = sphi 0, %s50
      %s67 = sphi 0, %s51
      %s73 = sphi 0, %s75
      %s76 = sphi 0, %s73
      %s77 = sphi 0, %s76
      %s93 = sphi 0, %s77
      %s97 = sphi 0, %s97
      %s99 = sphi 0, %s97
      %s100 = sphi 0, %s99
      %s114 = sphi 0, %s100
      %s118 = sphi 0, %s118
      %s120 = sphi 0, %s118
      %s121 = sphi 0, %s120
      %s135 = sphi 0, %s121
      %s139 = sphi 0, %s139
      %s141 = sphi 0, %s139
      %s142 = sphi 0, %s141
      %s156 = sphi 0, %s142
      %s160 = sphi 0, %s160
      %s162 = sphi 0, %s160
      %s163 = sphi 0, %s162
      %s177 = sphi 0, %s163
      %s185 = sphi 0, %s187
      %s188 = sphi 0, %s185
      %s189 = sphi 0, %s188
      %s205 = sphi 0, %s189
    $region4: #{tpu_custom_call.1} parent=1 // loop_header_branch
      %26 = sbr.rel (%p24) target = $region8
    $region5: #{tpu_custom_call.1} parent=1 // loop_body
      %s28 = ssub.s32 %s23, 1
      %s29 = ssub.s32 %s23, 2
      %s36 = sadd.s32 1, %s31
      %p37 = scmp.ge.s32.totalorder %s36, 2
      %s38 = scalar_select %p37, 0, %s36
      %s39 = sadd.s32 1, %s30
      %s40 = scalar_select %p37, %s39, %s30
      %p41 = scmp.ge.s32.totalorder %s40, 2
      %s42 = scalar_select %p41, 0, %s40
      %s43 = ssub.s32 %s30, %s42
      %s44 = ssub.s32 %s31, %s38
      %s45 = sor.u32 %s43, %s44
      %p46 = scmp.eq.s32.totalorder %s45, 0
      %s48 = sadd.s32 %s47, 1
      %s49 = scalar_select %p46, %s47, %s48
      %p52 = pneg %p46
      %p53 = scmp.eq.s32.totalorder %s23, 3
      %p54 = por %p52, %p53
      %p55 = scmp.ne.s32.totalorder %s47, %s50
      %p56 = scmp.eq.s32.totalorder %s23, 0
      %p57 = por %p55, %p56
      %p58 = scmp.ne.s32.totalorder %s47, %s50
      %p59 = scmp.eq.s32.totalorder %s28, 3
      %p60 = por %p58, %p59
      %p61 = scmp.ne.s32.totalorder %s50, %s51
      %p62 = scmp.eq.s32.totalorder %s28, 0
      %p63 = por %p61, %p62
      %p64 = scmp.ne.s32.totalorder %s50, %s51
      %p65 = scmp.eq.s32.totalorder %s29, 3
      %p66 = por %p64, %p65
      %p68 = scmp.ne.s32.totalorder %s51, %s67
      %p69 = scmp.eq.s32.totalorder %s29, 0
      %p70 = por %p68, %p69
      %s71 = ssub.s32 %s30, %s42
      %p72 = scmp.eq.s32.totalorder %s71, 0
      %s74 = sadd.s32 %s73, 1
      %s75 = scalar_select %p72, %s73, %s74
      %p78 = pneg %p72
      %p79 = scmp.eq.s32.totalorder %s23, 3
      %p80 = por %p78, %p79
      %p81 = scmp.ne.s32.totalorder %s73, %s76
      %p82 = scmp.eq.s32.totalorder %s23, 0
      %p83 = por %p81, %p82
      %p84 = scmp.ne.s32.totalorder %s73, %s76
      %p85 = scmp.eq.s32.totalorder %s28, 3
      %p86 = por %p84, %p85
      %p87 = scmp.ne.s32.totalorder %s76, %s77
      %p88 = scmp.eq.s32.totalorder %s28, 0
      %p89 = por %p87, %p88
      %p90 = scmp.ne.s32.totalorder %s76, %s77
      %p91 = scmp.eq.s32.totalorder %s29, 3
      %p92 = por %p90, %p91
      %p94 = scmp.ne.s32.totalorder %s77, %s93
      %p95 = scmp.eq.s32.totalorder %s29, 0
      %p96 = por %p94, %p95
      %s98 = sadd.s32 %s97, 1
      %p101 = scmp.eq.s32.totalorder %s23, 3
      %p102 = scmp.ne.s32.totalorder %s97, %s99
      %p103 = scmp.eq.s32.totalorder %s23, 0
      %p104 = por %p102, %p103
      %p105 = scmp.ne.s32.totalorder %s97, %s99
      %p106 = scmp.eq.s32.totalorder %s28, 3
      %p107 = por %p105, %p106
      %p108 = scmp.ne.s32.totalorder %s99, %s100
      %p109 = scmp.eq.s32.totalorder %s28, 0
      %p110 = por %p108, %p109
      %p111 = scmp.ne.s32.totalorder %s99, %s100
      %p112 = scmp.eq.s32.totalorder %s29, 3
      %p113 = por %p111, %p112
      %p115 = scmp.ne.s32.totalorder %s100, %s114
      %p116 = scmp.eq.s32.totalorder %s29, 0
      %p117 = por %p115, %p116
      %s119 = sadd.s32 %s118, 1
      %p122 = scmp.eq.s32.totalorder %s23, 3
      %p123 = scmp.ne.s32.totalorder %s118, %s120
      %p124 = scmp.eq.s32.totalorder %s23, 0
      %p125 = por %p123, %p124
      %p126 = scmp.ne.s32.totalorder %s118, %s120
      %p127 = scmp.eq.s32.totalorder %s28, 3
      %p128 = por %p126, %p127
      %p129 = scmp.ne.s32.totalorder %s120, %s121
      %p130 = scmp.eq.s32.totalorder %s28, 0
      %p131 = por %p129, %p130
      %p132 = scmp.ne.s32.totalorder %s120, %s121
      %p133 = scmp.eq.s32.totalorder %s29, 3
      %p134 = por %p132, %p133
      %p136 = scmp.ne.s32.totalorder %s121, %s135
      %p137 = scmp.eq.s32.totalorder %s29, 0
      %p138 = por %p136, %p137
      %s140 = sadd.s32 %s139, 1
      %p143 = scmp.eq.s32.totalorder %s23, 3
      %p144 = scmp.ne.s32.totalorder %s139, %s141
      %p145 = scmp.eq.s32.totalorder %s23, 0
      %p146 = por %p144, %p145
      %p147 = scmp.ne.s32.totalorder %s139, %s141
      %p148 = scmp.eq.s32.totalorder %s28, 3
      %p149 = por %p147, %p148
      %p150 = scmp.ne.s32.totalorder %s141, %s142
      %p151 = scmp.eq.s32.totalorder %s28, 0
      %p152 = por %p150, %p151
      %p153 = scmp.ne.s32.totalorder %s141, %s142
      %p154 = scmp.eq.s32.totalorder %s29, 3
      %p155 = por %p153, %p154
      %p157 = scmp.ne.s32.totalorder %s142, %s156
      %p158 = scmp.eq.s32.totalorder %s29, 0
      %p159 = por %p157, %p158
      %s161 = sadd.s32 %s160, 1
      %p164 = scmp.eq.s32.totalorder %s23, 3
      %p165 = scmp.ne.s32.totalorder %s160, %s162
      %p166 = scmp.eq.s32.totalorder %s23, 0
      %p167 = por %p165, %p166
      %p168 = scmp.ne.s32.totalorder %s160, %s162
      %p169 = scmp.eq.s32.totalorder %s28, 3
      %p170 = por %p168, %p169
      %p171 = scmp.ne.s32.totalorder %s162, %s163
      %p172 = scmp.eq.s32.totalorder %s28, 0
      %p173 = por %p171, %p172
      %p174 = scmp.ne.s32.totalorder %s162, %s163
      %p175 = scmp.eq.s32.totalorder %s29, 3
      %p176 = por %p174, %p175
      %p178 = scmp.ne.s32.totalorder %s163, %s177
      %p179 = scmp.eq.s32.totalorder %s29, 0
      %p180 = por %p178, %p179
      %s181 = ssub.s32 %s30, %s42
      %s182 = ssub.s32 %s31, %s38
      %s183 = sor.u32 %s181, %s182
      %p184 = scmp.eq.s32.totalorder %s183, 0
      %s186 = sadd.s32 %s185, 1
      %s187 = scalar_select %p184, %s185, %s186
      %p190 = pneg %p184
      %p191 = scmp.eq.s32.totalorder %s23, 3
      %p192 = por %p190, %p191
      %p193 = scmp.ne.s32.totalorder %s185, %s188
      %p194 = scmp.eq.s32.totalorder %s23, 0
      %p195 = por %p193, %p194
      %p196 = scmp.ne.s32.totalorder %s185, %s188
      %p197 = scmp.eq.s32.totalorder %s28, 3
      %p198 = por %p196, %p197
      %p199 = scmp.ne.s32.totalorder %s188, %s189
      %p200 = scmp.eq.s32.totalorder %s28, 0
      %p201 = por %p199, %p200
      %p202 = scmp.ne.s32.totalorder %s188, %s189
      %p203 = scmp.eq.s32.totalorder %s29, 3
      %p204 = por %p202, %p203
      %p206 = scmp.ne.s32.totalorder %s189, %s205
      %p207 = scmp.eq.s32.totalorder %s29, 0
      %p208 = por %p206, %p207
      %p209 = scmp.le.s32.totalorder 1, %s23
      %p210 = scmp.lt.s32.totalorder %s23, 5
      %p211 = pnand %p209, %p210
      %p212 = pneg %p211
      // Predicated region
      $region9: #{tpu_custom_call.1} parent=5 // pred_check
        _
      $region10: #{tpu_custom_call.1} parent=5 // pred_check_branch
        %214 = sbr.rel (%p211) target = $region12
      $region11: #{tpu_custom_call.1} parent=5 // pred_region
        %s215 = ssub.s32 %s23, 1
        // Predicated region
        $region13: #{tpu_custom_call.1} parent=11 // pred_check
          %p216 = pneg %p110
        $region14: #{tpu_custom_call.1} parent=11 // pred_check_branch
          %218 = sbr.rel (%p216) target = $region16
        $region15: #{tpu_custom_call.1} parent=11 // pred_region
          %s220 = ssub.s32 8192, 8192
          %221 = vsyncadd [#allocation9], %s220
          %s222 = sshll.u32 [#allocation10], 4
          %s223 = int_to_ptr.vmem [resolvable:$true] %s222
          %228 = dma.hbm_to_vmem [thread:$0]  %s2, 8192, %s223, [#allocation9], 256, 256, 16
        $region16: #{tpu_custom_call.1} parent=11 // pred_fallthru
          _
        // Predicated region
        $region17: #{tpu_custom_call.1} parent=11 // pred_check
          %p229 = pneg %p131
        $region18: #{tpu_custom_call.1} parent=11 // pred_check_branch
          %231 = sbr.rel (%p229) target = $region20
        $region19: #{tpu_custom_call.1} parent=11 // pred_region
          %s233 = ssub.s32 8192, 8192
          %234 = vsyncadd [#allocation12], %s233
          %s235 = sshll.u32 [#allocation11], 4
          %s236 = int_to_ptr.vmem [resolvable:$true] %s235
          %241 = dma.hbm_to_vmem [thread:$0]  %s3, 8192, %s236, [#allocation12], 256, 256, 16
        $region20: #{tpu_custom_call.1} parent=11 // pred_fallthru
          _
        // Predicated region
        $region21: #{tpu_custom_call.1} parent=11 // pred_check
          %p242 = pneg %p152
        $region22: #{tpu_custom_call.1} parent=11 // pred_check_branch
          %244 = sbr.rel (%p242) target = $region24
        $region23: #{tpu_custom_call.1} parent=11 // pred_region
          %s246 = ssub.s32 8192, 8192
          %247 = vsyncadd [#allocation12], %s246
          %s248 = sshll.u32 [#allocation13], 4
          %s249 = int_to_ptr.vmem [resolvable:$true] %s248
          %254 = dma.hbm_to_vmem [thread:$0]  %s4, 8192, %s249, [#allocation12], 256, 256, 16
        $region24: #{tpu_custom_call.1} parent=11 // pred_fallthru
          _
        // Predicated region
        $region25: #{tpu_custom_call.1} parent=11 // pred_check
          %p255 = pneg %p173
        $region26: #{tpu_custom_call.1} parent=11 // pred_check_branch
          %257 = sbr.rel (%p255) target = $region28
        $region27: #{tpu_custom_call.1} parent=11 // pred_region
          %s259 = ssub.s32 8192, 8192
          %260 = vsyncadd [#allocation15], %s259
          %s261 = sshll.u32 [#allocation14], 4
          %s262 = int_to_ptr.vmem [resolvable:$true] %s261
          %267 = dma.hbm_to_vmem [thread:$0]  %s5, 8192, %s262, [#allocation15], 256, 256, 16
        $region28: #{tpu_custom_call.1} parent=11 // pred_fallthru
          _
      $region12: #{tpu_custom_call.1} parent=5 // pred_fallthru
        _
      %p268 = scmp.lt.s32.totalorder %s23, 4
      // Predicated region
      $region29: #{tpu_custom_call.1} parent=5 // pred_check
        %p269 = pneg %p268
      $region30: #{tpu_custom_call.1} parent=5 // pred_check_branch
        %271 = sbr.rel (%p269) target = $region32
      $region31: #{tpu_custom_call.1} parent=5 // pred_region
        // Predicated region
        $region33: #{tpu_custom_call.1} parent=31 // pred_check
          %p272 = pneg %p57
        $region34: #{tpu_custom_call.1} parent=31 // pred_check_branch
          %274 = sbr.rel (%p272) target = $region36
        $region35: #{tpu_custom_call.1} parent=31 // pred_region
          %s275 = sand.u32 %s47, 1
          %s276 = scalar_lea.sflag [#allocation6], %s275
          %s277 = sand.u32 %s47, 1
          %s278 = smul.addr %s277, 16
          %s279 = scalar_lea.vmem [#allocation5], %s278
          %s281 = ssub.s32 256, 256
          %282 = vsyncadd %s276, %s281
          %s283 = smul.addr %s31, 2
          %s284 = smul.addr %s30, 4
          %s285 = sadd.s32 %s283, %s284
          %s286 = smul.addr %s285, 128
          %s287 = scalar_lea.hbm %s0, %s286
          %s289 = sshll.u32 %s279, 4
          %s290 = int_to_ptr.vmem [resolvable:$true] %s289
          %292 = dma.hbm_to_vmem [thread:$0]  %s287, 256, %s290, %s276
        $region36: #{tpu_custom_call.1} parent=31 // pred_fallthru
          _
        // Predicated region
        $region37: #{tpu_custom_call.1} parent=31 // pred_check
          %p293 = pneg %p83
        $region38: #{tpu_custom_call.1} parent=31 // pred_check_branch
          %295 = sbr.rel (%p293) target = $region40
        $region39: #{tpu_custom_call.1} parent=31 // pred_region
          %s296 = sand.u32 %s23, 1
          %s297 = scalar_lea.sflag [#allocation9], %s296
          %s298 = sand.u32 %s73, 1
          %s299 = smul.addr %s298, 32
          %s300 = scalar_lea.vmem [#allocation8], %s299
          %s302 = ssub.s32 512, 512
          %303 = vsyncadd %s297, %s302
          %s304 = smul.addr %s30, 4
          %s305 = smul.addr %s304, 128
          %s306 = scalar_lea.hbm %s1, %s305
          %s307 = sshll.u32 %s300, 4
          %s308 = int_to_ptr.vmem [resolvable:$true] %s307
          %313 = dma.hbm_to_vmem [thread:$0]  %s306, 512, %s308, %s297, 256, 256, 16
        $region40: #{tpu_custom_call.1} parent=31 // pred_fallthru
          _
      $region32: #{tpu_custom_call.1} parent=5 // pred_fallthru
        _
      %p314 = scmp.le.s32.totalorder 1, %s23
      %p315 = scmp.lt.s32.totalorder %s23, 5
      %p316 = pnand %p314, %p315
      %p317 = pneg %p316
      // Predicated region
      $region41: #{tpu_custom_call.1} parent=5 // pred_check
        _
      $region42: #{tpu_custom_call.1} parent=5 // pred_check_branch
        %319 = sbr.rel (%p316) target = $region44
      $region43: #{tpu_custom_call.1} parent=5 // pred_region
        %s320 = ssub.s32 %s23, 1
        %s321 = sand.u32 %s50, 1
        %s322 = scalar_lea.sflag [#allocation6], %s321
        %s323 = sand.u32 %s50, 1
        %s324 = smul.addr %s323, 16
        %s325 = scalar_lea.vmem [#allocation5], %s324
        // Predicated region
        $region45: #{tpu_custom_call.1} parent=43 // pred_check
          %p326 = pneg %p63
        $region46: #{tpu_custom_call.1} parent=43 // pred_check_branch
          %328 = sbr.rel (%p326) target = $region48
        $region47: #{tpu_custom_call.1} parent=43 // pred_region
          %329 = dma.done %s322, 256
        $region48: #{tpu_custom_call.1} parent=43 // pred_fallthru
          _
        %s330 = sand.u32 %s28, 1
        %s331 = scalar_lea.sflag [#allocation9], %s330
        %s332 = sand.u32 %s76, 1
        %s333 = smul.addr %s332, 32
        %s334 = scalar_lea.vmem [#allocation8], %s333
        // Predicated region
        $region49: #{tpu_custom_call.1} parent=43 // pred_check
          %p335 = pneg %p89
        $region50: #{tpu_custom_call.1} parent=43 // pred_check_branch
          %337 = sbr.rel (%p335) target = $region52
        $region51: #{tpu_custom_call.1} parent=43 // pred_region
          %338 = dma.done %s331, 512
        $region52: #{tpu_custom_call.1} parent=43 // pred_fallthru
          _
        // Predicated region
        $region53: #{tpu_custom_call.1} parent=43 // pred_check
          %p339 = pneg %p110
        $region54: #{tpu_custom_call.1} parent=43 // pred_check_branch
          %341 = sbr.rel (%p339) target = $region56
        $region55: #{tpu_custom_call.1} parent=43 // pred_region
          %342 = dma.done [#allocation9], 8192
        $region56: #{tpu_custom_call.1} parent=43 // pred_fallthru
          _
        // Predicated region
        $region57: #{tpu_custom_call.1} parent=43 // pred_check
          %p343 = pneg %p131
        $region58: #{tpu_custom_call.1} parent=43 // pred_check_branch
          %345 = sbr.rel (%p343) target = $region60
        $region59: #{tpu_custom_call.1} parent=43 // pred_region
          %346 = dma.done [#allocation12], 8192
        $region60: #{tpu_custom_call.1} parent=43 // pred_fallthru
          _
        // Predicated region
        $region61: #{tpu_custom_call.1} parent=43 // pred_check
          %p347 = pneg %p152
        $region62: #{tpu_custom_call.1} parent=43 // pred_check_branch
          %349 = sbr.rel (%p347) target = $region64
        $region63: #{tpu_custom_call.1} parent=43 // pred_region
          %350 = dma.done [#allocation12], 8192
        $region64: #{tpu_custom_call.1} parent=43 // pred_fallthru
          _
        // Predicated region
        $region65: #{tpu_custom_call.1} parent=43 // pred_check
          %p351 = pneg %p173
        $region66: #{tpu_custom_call.1} parent=43 // pred_check_branch
          %353 = sbr.rel (%p351) target = $region68
        $region67: #{tpu_custom_call.1} parent=43 // pred_region
          %354 = dma.done [#allocation15], 8192
        $region68: #{tpu_custom_call.1} parent=43 // pred_fallthru
          _
        %s355 = sand.u32 %s50, 1
        %s356 = scalar_lea.sflag [#allocation6], %s355
        %s357 = sand.u32 %s50, 1
        %s358 = smul.addr %s357, 16
        %s359 = scalar_lea.vmem [#allocation5], %s358
        %p360 = pneg %p63
        %p361 = pneg %p60
        %s362 = sand.u32 %s28, 1
        %s363 = scalar_lea.sflag [#allocation9], %s362
        %s364 = sand.u32 %s76, 1
        %s365 = smul.addr %s364, 32
        %s366 = scalar_lea.vmem [#allocation8], %s365
        %p367 = pneg %p89
        %p368 = pneg %p86
        %p369 = pneg %p110
        %p370 = pneg %p107
        %p371 = pneg %p131
        %p372 = pneg %p128
        %p373 = pneg %p152
        %p374 = pneg %p149
        %p375 = pneg %p173
        %p376 = pneg %p170
        %p377 = pneg %p201
        %p378 = pneg %p198
        %s379 = sand.u32 %s188, 1
        %s380 = scalar_lea.sflag [#allocation7], %s379
        %s381 = sand.u32 %s188, 1
        %s382 = smul.addr %s381, 16
        %s383 = scalar_lea.vmem [#allocation16], %s382
        %p384 = scmp.eq.s32.totalorder %s33, 0
        // Predicated region
        $region69: #{tpu_custom_call.1} parent=43 // pred_check
          %p385 = pneg %p384
        $region70: #{tpu_custom_call.1} parent=43 // pred_check_branch
          %387 = sbr.rel (%p385) target = $region72
        $region71: #{tpu_custom_call.1} parent=43 // pred_region
          %v388 = vld [vmem:[%s334] sm:$0xff]
          %v389 = vld [vmem:[%s334 + $0x8] sm:$0xff]
          %v390 = vld [vmem:[%s334 + $0x10] sm:$0xff]
          %v391 = vld [vmem:[%s334 + $0x18] sm:$0xff]
          %v392 = vld [vmem:[#allocation11] sm:$0xff]
          %v393 = vld [vmem:[#allocation11 + $0x8] sm:$0xff]
          %v394 = vld [vmem:[#allocation11 + $0x10] sm:$0xff]
          %v395 = vld [vmem:[#allocation11 + $0x18] sm:$0xff]
          %v396 = vld [vmem:[#allocation11 + $0x20] sm:$0xff]
          %v397 = vld [vmem:[#allocation11 + $0x28] sm:$0xff]
          %v398 = vld [vmem:[#allocation11 + $0x30] sm:$0xff]
          %v399 = vld [vmem:[#allocation11 + $0x38] sm:$0xff]
          %v400 = vld [vmem:[#allocation11 + $0x40] sm:$0xff]
          %v401 = vld [vmem:[#allocation11 + $0x48] sm:$0xff]
          %v402 = vld [vmem:[#allocation11 + $0x50] sm:$0xff]
          %v403 = vld [vmem:[#allocation11 + $0x58] sm:$0xff]
          %v404 = vld [vmem:[#allocation11 + $0x60] sm:$0xff]
          %v405 = vld [vmem:[#allocation11 + $0x68] sm:$0xff]
          %v406 = vld [vmem:[#allocation11 + $0x70] sm:$0xff]
          %v407 = vld [vmem:[#allocation11 + $0x78] sm:$0xff]
          %v408 = vld [vmem:[#allocation11 + $0x80] sm:$0xff]
          %v409 = vld [vmem:[#allocation11 + $0x88] sm:$0xff]
          %v410 = vld [vmem:[#allocation11 + $0x90] sm:$0xff]
          %v411 = vld [vmem:[#allocation11 + $0x98] sm:$0xff]
          %v412 = vld [vmem:[#allocation11 + $0xa0] sm:$0xff]
          %v413 = vld [vmem:[#allocation11 + $0xa8] sm:$0xff]
          %v414 = vld [vmem:[#allocation11 + $0xb0] sm:$0xff]
          %v415 = vld [vmem:[#allocation11 + $0xb8] sm:$0xff]
          %v416 = vld [vmem:[#allocation11 + $0xc0] sm:$0xff]
          %v417 = vld [vmem:[#allocation11 + $0xc8] sm:$0xff]
          %v418 = vld [vmem:[#allocation11 + $0xd0] sm:$0xff]
          %v419 = vld [vmem:[#allocation11 + $0xd8] sm:$0xff]
          %v420 = vld [vmem:[#allocation11 + $0xe0] sm:$0xff]
          %v421 = vld [vmem:[#allocation11 + $0xe8] sm:$0xff]
          %v422 = vld [vmem:[#allocation11 + $0xf0] sm:$0xff]
          %v423 = vld [vmem:[#allocation11 + $0xf8] sm:$0xff]
          %v424 = vld [vmem:[#allocation11 + $0x100] sm:$0xff]
          %v425 = vld [vmem:[#allocation11 + $0x108] sm:$0xff]
          %v426 = vld [vmem:[#allocation11 + $0x110] sm:$0xff]
          %v427 = vld [vmem:[#allocation11 + $0x118] sm:$0xff]
          %v428 = vld [vmem:[#allocation11 + $0x120] sm:$0xff]
          %v429 = vld [vmem:[#allocation11 + $0x128] sm:$0xff]
          %v430 = vld [vmem:[#allocation11 + $0x130] sm:$0xff]
          %v431 = vld [vmem:[#allocation11 + $0x138] sm:$0xff]
          %v432 = vld [vmem:[#allocation11 + $0x140] sm:$0xff]
          %v433 = vld [vmem:[#allocation11 + $0x148] sm:$0xff]
          %v434 = vld [vmem:[#allocation11 + $0x150] sm:$0xff]
          %v435 = vld [vmem:[#allocation11 + $0x158] sm:$0xff]
          %v436 = vld [vmem:[#allocation11 + $0x160] sm:$0xff]
          %v437 = vld [vmem:[#allocation11 + $0x168] sm:$0xff]
          %v438 = vld [vmem:[#allocation11 + $0x170] sm:$0xff]
          %v439 = vld [vmem:[#allocation11 + $0x178] sm:$0xff]
          %v440 = vld [vmem:[#allocation11 + $0x180] sm:$0xff]
          %v441 = vld [vmem:[#allocation11 + $0x188] sm:$0xff]
          %v442 = vld [vmem:[#allocation11 + $0x190] sm:$0xff]
          %v443 = vld [vmem:[#allocation11 + $0x198] sm:$0xff]
          %v444 = vld [vmem:[#allocation11 + $0x1a0] sm:$0xff]
          %v445 = vld [vmem:[#allocation11 + $0x1a8] sm:$0xff]
          %v446 = vld [vmem:[#allocation11 + $0x1b0] sm:$0xff]
          %v447 = vld [vmem:[#allocation11 + $0x1b8] sm:$0xff]
          %v448 = vld [vmem:[#allocation11 + $0x1c0] sm:$0xff]
          %v449 = vld [vmem:[#allocation11 + $0x1c8] sm:$0xff]
          %v450 = vld [vmem:[#allocation11 + $0x1d0] sm:$0xff]
          %v451 = vld [vmem:[#allocation11 + $0x1d8] sm:$0xff]
          %v452 = vld [vmem:[#allocation11 + $0x1e0] sm:$0xff]
          %v453 = vld [vmem:[#allocation11 + $0x1e8] sm:$0xff]
          %v454 = vld [vmem:[#allocation11 + $0x1f0] sm:$0xff]
          %v455 = vld [vmem:[#allocation11 + $0x1f8] sm:$0xff]
          %456 = vmatprep.subr.mxu0 %v393
          %457 = vmatpush1.xpose.msra.mxu0 %v392
          %458 = vmatprep.subr.mxu0 %v395
          %459 = vmatpush1.xpose.msra.mxu0 %v394
          %460 = vmatprep.subr.mxu0 %v397
          %461 = vmatpush1.xpose.msra.mxu0 %v396
          %462 = vmatprep.subr.mxu0 %v399
          %463 = vmatpush1.xpose.msra.mxu0 %v398
          %464 = vmatprep.subr.mxu0 %v401
          %465 = vmatpush1.xpose.msra.mxu0 %v400
          %466 = vmatprep.subr.mxu0 %v403
          %467 = vmatpush1.xpose.msra.mxu0 %v402
          %468 = vmatprep.subr.mxu0 %v405
          %469 = vmatpush1.xpose.msra.mxu0 %v404
          %470 = vmatprep.subr.mxu0 %v407
          %471 = vmatpush1.xpose.msra.mxu0 %v406
          %472 = vmatprep.subr.mxu0 %v409
          %473 = vmatpush1.xpose.msra.mxu0 %v408
          %474 = vmatprep.subr.mxu0 %v411
          %475 = vmatpush1.xpose.msra.mxu0 %v410
          %476 = vmatprep.subr.mxu0 %v413
          %477 = vmatpush1.xpose.msra.mxu0 %v412
          %478 = vmatprep.subr.mxu0 %v415
          %479 = vmatpush1.xpose.msra.mxu0 %v414
          %480 = vmatprep.subr.mxu0 %v417
          %481 = vmatpush1.xpose.msra.mxu0 %v416
          %482 = vmatprep.subr.mxu0 %v419
          %483 = vmatpush1.xpose.msra.mxu0 %v418
          %484 = vmatprep.subr.mxu0 %v421
          %485 = vmatpush1.xpose.msra.mxu0 %v420
          %486 = vmatprep.subr.mxu0 %v423
          %487 = vmatpush1.xpose.msra.mxu0 %v422
          %488 = vmatprep.subr.mxu0 %v425
          %489 = vmatpush1.xpose.msra.mxu0 %v424
          %490 = vmatprep.subr.mxu0 %v427
          %491 = vmatpush1.xpose.msra.mxu0 %v426
          %492 = vmatprep.subr.mxu0 %v429
          %493 = vmatpush1.xpose.msra.mxu0 %v428
          %494 = vmatprep.subr.mxu0 %v431
          %495 = vmatpush1.xpose.msra.mxu0 %v430
          %496 = vmatprep.subr.mxu0 %v433
          %497 = vmatpush1.xpose.msra.mxu0 %v432
          %498 = vmatprep.subr.mxu0 %v435
          %499 = vmatpush1.xpose.msra.mxu0 %v434
          %500 = vmatprep.subr.mxu0 %v437
          %501 = vmatpush1.xpose.msra.mxu0 %v436
          %502 = vmatprep.subr.mxu0 %v439
          %503 = vmatpush1.xpose.msra.mxu0 %v438
          %504 = vmatprep.subr.mxu0 %v441
          %505 = vmatpush1.xpose.msra.mxu0 %v440
          %506 = vmatprep.subr.mxu0 %v443
          %507 = vmatpush1.xpose.msra.mxu0 %v442
          %508 = vmatprep.subr.mxu0 %v445
          %509 = vmatpush1.xpose.msra.mxu0 %v444
          %510 = vmatprep.subr.mxu0 %v447
          %511 = vmatpush1.xpose.msra.mxu0 %v446
          %512 = vmatprep.subr.mxu0 %v449
          %513 = vmatpush1.xpose.msra.mxu0 %v448
          %514 = vmatprep.subr.mxu0 %v451
          %515 = vmatpush1.xpose.msra.mxu0 %v450
          %516 = vmatprep.subr.mxu0 %v453
          %517 = vmatpush1.xpose.msra.mxu0 %v452
          %518 = vmatprep.subr.mxu0 %v455
          %519 = vmatpush1.xpose.msra.mxu0 %v454
          %520 = vmatprep.mubr.f32.mxu0 %v389
          %521 = vmatmul.mubr.f32.gmra.mrb[0].mxu0 %v388
          %v522 = vpop.f32.mrb[0].mxu0
          %v523 = vadd.f32 0.0, %v522
          %v524 = vpop.f32.mrb[0].mxu0
          %v525 = vadd.f32 0.0, %v524
          %526 = vmatprep.mubr.f32.mxu0 %v391
          %527 = vmatmul.mubr.f32.gmra.mrb[0].mxu0 %v390
          %v528 = vpop.f32.mrb[0].mxu0
          %v529 = vadd.f32 0.0, %v528
          %v530 = vpop.f32.mrb[0].mxu0
          %v531 = vadd.f32 0.0, %v530
          %532 = vdwg.mxu0
          %533 = vst [vmem:[#allocation2] sm:$0xff] %v523
          %534 = vst [vmem:[#allocation2 + $0x8] sm:$0xff] %v525
          %535 = vst [vmem:[#allocation2 + $0x10] sm:$0xff] %v529
          %536 = vst [vmem:[#allocation2 + $0x18] sm:$0xff] %v531
          %v537 = vld [vmem:[#allocation13] sm:$0xff]
          %v538 = vld [vmem:[#allocation13 + $0x8] sm:$0xff]
          %v539 = vld [vmem:[#allocation13 + $0x10] sm:$0xff]
          %v540 = vld [vmem:[#allocation13 + $0x18] sm:$0xff]
          %v541 = vld [vmem:[#allocation13 + $0x20] sm:$0xff]
          %v542 = vld [vmem:[#allocation13 + $0x28] sm:$0xff]
          %v543 = vld [vmem:[#allocation13 + $0x30] sm:$0xff]
          %v544 = vld [vmem:[#allocation13 + $0x38] sm:$0xff]
          %v545 = vld [vmem:[#allocation13 + $0x40] sm:$0xff]
          %v546 = vld [vmem:[#allocation13 + $0x48] sm:$0xff]
          %v547 = vld [vmem:[#allocation13 + $0x50] sm:$0xff]
          %v548 = vld [vmem:[#allocation13 + $0x58] sm:$0xff]
          %v549 = vld [vmem:[#allocation13 + $0x60] sm:$0xff]
          %v550 = vld [vmem:[#allocation13 + $0x68] sm:$0xff]
          %v551 = vld [vmem:[#allocation13 + $0x70] sm:$0xff]
          %v552 = vld [vmem:[#allocation13 + $0x78] sm:$0xff]
          %v553 = vld [vmem:[#allocation13 + $0x80] sm:$0xff]
          %v554 = vld [vmem:[#allocation13 + $0x88] sm:$0xff]
          %v555 = vld [vmem:[#allocation13 + $0x90] sm:$0xff]
          %v556 = vld [vmem:[#allocation13 + $0x98] sm:$0xff]
          %v557 = vld [vmem:[#allocation13 + $0xa0] sm:$0xff]
          %v558 = vld [vmem:[#allocation13 + $0xa8] sm:$0xff]
          %v559 = vld [vmem:[#allocation13 + $0xb0] sm:$0xff]
          %v560 = vld [vmem:[#allocation13 + $0xb8] sm:$0xff]
          %v561 = vld [vmem:[#allocation13 + $0xc0] sm:$0xff]
          %v562 = vld [vmem:[#allocation13 + $0xc8] sm:$0xff]
          %v563 = vld [vmem:[#allocation13 + $0xd0] sm:$0xff]
          %v564 = vld [vmem:[#allocation13 + $0xd8] sm:$0xff]
          %v565 = vld [vmem:[#allocation13 + $0xe0] sm:$0xff]
          %v566 = vld [vmem:[#allocation13 + $0xe8] sm:$0xff]
          %v567 = vld [vmem:[#allocation13 + $0xf0] sm:$0xff]
          %v568 = vld [vmem:[#allocation13 + $0xf8] sm:$0xff]
          %v569 = vld [vmem:[#allocation13 + $0x100] sm:$0xff]
          %v570 = vld [vmem:[#allocation13 + $0x108] sm:$0xff]
          %v571 = vld [vmem:[#allocation13 + $0x110] sm:$0xff]
          %v572 = vld [vmem:[#allocation13 + $0x118] sm:$0xff]
          %v573 = vld [vmem:[#allocation13 + $0x120] sm:$0xff]
          %v574 = vld [vmem:[#allocation13 + $0x128] sm:$0xff]
          %v575 = vld [vmem:[#allocation13 + $0x130] sm:$0xff]
          %v576 = vld [vmem:[#allocation13 + $0x138] sm:$0xff]
          %v577 = vld [vmem:[#allocation13 + $0x140] sm:$0xff]
          %v578 = vld [vmem:[#allocation13 + $0x148] sm:$0xff]
          %v579 = vld [vmem:[#allocation13 + $0x150] sm:$0xff]
          %v580 = vld [vmem:[#allocation13 + $0x158] sm:$0xff]
          %v581 = vld [vmem:[#allocation13 + $0x160] sm:$0xff]
          %v582 = vld [vmem:[#allocation13 + $0x168] sm:$0xff]
          %v583 = vld [vmem:[#allocation13 + $0x170] sm:$0xff]
          %v584 = vld [vmem:[#allocation13 + $0x178] sm:$0xff]
          %v585 = vld [vmem:[#allocation13 + $0x180] sm:$0xff]
          %v586 = vld [vmem:[#allocation13 + $0x188] sm:$0xff]
          %v587 = vld [vmem:[#allocation13 + $0x190] sm:$0xff]
          %v588 = vld [vmem:[#allocation13 + $0x198] sm:$0xff]
          %v589 = vld [vmem:[#allocation13 + $0x1a0] sm:$0xff]
          %v590 = vld [vmem:[#allocation13 + $0x1a8] sm:$0xff]
          %v591 = vld [vmem:[#allocation13 + $0x1b0] sm:$0xff]
          %v592 = vld [vmem:[#allocation13 + $0x1b8] sm:$0xff]
          %v593 = vld [vmem:[#allocation13 + $0x1c0] sm:$0xff]
          %v594 = vld [vmem:[#allocation13 + $0x1c8] sm:$0xff]
          %v595 = vld [vmem:[#allocation13 + $0x1d0] sm:$0xff]
          %v596 = vld [vmem:[#allocation13 + $0x1d8] sm:$0xff]
          %v597 = vld [vmem:[#allocation13 + $0x1e0] sm:$0xff]
          %v598 = vld [vmem:[#allocation13 + $0x1e8] sm:$0xff]
          %v599 = vld [vmem:[#allocation13 + $0x1f0] sm:$0xff]
          %v600 = vld [vmem:[#allocation13 + $0x1f8] sm:$0xff]
          %601 = vmatprep.subr.mxu0 %v538
          %602 = vmatpush1.xpose.msra.mxu0 %v537
          %603 = vmatprep.subr.mxu0 %v540
          %604 = vmatpush1.xpose.msra.mxu0 %v539
          %605 = vmatprep.subr.mxu0 %v542
          %606 = vmatpush1.xpose.msra.mxu0 %v541
          %607 = vmatprep.subr.mxu0 %v544
          %608 = vmatpush1.xpose.msra.mxu0 %v543
          %609 = vmatprep.subr.mxu0 %v546
          %610 = vmatpush1.xpose.msra.mxu0 %v545
          %611 = vmatprep.subr.mxu0 %v548
          %612 = vmatpush1.xpose.msra.mxu0 %v547
          %613 = vmatprep.subr.mxu0 %v550
          %614 = vmatpush1.xpose.msra.mxu0 %v549
          %615 = vmatprep.subr.mxu0 %v552
          %616 = vmatpush1.xpose.msra.mxu0 %v551
          %617 = vmatprep.subr.mxu0 %v554
          %618 = vmatpush1.xpose.msra.mxu0 %v553
          %619 = vmatprep.subr.mxu0 %v556
          %620 = vmatpush1.xpose.msra.mxu0 %v555
          %621 = vmatprep.subr.mxu0 %v558
          %622 = vmatpush1.xpose.msra.mxu0 %v557
          %623 = vmatprep.subr.mxu0 %v560
          %624 = vmatpush1.xpose.msra.mxu0 %v559
          %625 = vmatprep.subr.mxu0 %v562
          %626 = vmatpush1.xpose.msra.mxu0 %v561
          %627 = vmatprep.subr.mxu0 %v564
          %628 = vmatpush1.xpose.msra.mxu0 %v563
          %629 = vmatprep.subr.mxu0 %v566
          %630 = vmatpush1.xpose.msra.mxu0 %v565
          %631 = vmatprep.subr.mxu0 %v568
          %632 = vmatpush1.xpose.msra.mxu0 %v567
          %633 = vmatprep.subr.mxu0 %v570
          %634 = vmatpush1.xpose.msra.mxu0 %v569
          %635 = vmatprep.subr.mxu0 %v572
          %636 = vmatpush1.xpose.msra.mxu0 %v571
          %637 = vmatprep.subr.mxu0 %v574
          %638 = vmatpush1.xpose.msra.mxu0 %v573
          %639 = vmatprep.subr.mxu0 %v576
          %640 = vmatpush1.xpose.msra.mxu0 %v575
          %641 = vmatprep.subr.mxu0 %v578
          %642 = vmatpush1.xpose.msra.mxu0 %v577
          %643 = vmatprep.subr.mxu0 %v580
          %644 = vmatpush1.xpose.msra.mxu0 %v579
          %645 = vmatprep.subr.mxu0 %v582
          %646 = vmatpush1.xpose.msra.mxu0 %v581
          %647 = vmatprep.subr.mxu0 %v584
          %648 = vmatpush1.xpose.msra.mxu0 %v583
          %649 = vmatprep.subr.mxu0 %v586
          %650 = vmatpush1.xpose.msra.mxu0 %v585
          %651 = vmatprep.subr.mxu0 %v588
          %652 = vmatpush1.xpose.msra.mxu0 %v587
          %653 = vmatprep.subr.mxu0 %v590
          %654 = vmatpush1.xpose.msra.mxu0 %v589
          %655 = vmatprep.subr.mxu0 %v592
          %656 = vmatpush1.xpose.msra.mxu0 %v591
          %657 = vmatprep.subr.mxu0 %v594
          %658 = vmatpush1.xpose.msra.mxu0 %v593
          %659 = vmatprep.subr.mxu0 %v596
          %660 = vmatpush1.xpose.msra.mxu0 %v595
          %661 = vmatprep.subr.mxu0 %v598
          %662 = vmatpush1.xpose.msra.mxu0 %v597
          %663 = vmatprep.subr.mxu0 %v600
          %664 = vmatpush1.xpose.msra.mxu0 %v599
          %665 = vmatprep.mubr.f32.mxu0 %v389
          %666 = vmatmul.mubr.f32.gmra.mrb[0].mxu0 %v388
          %v667 = vpop.f32.mrb[0].mxu0
          %v668 = vadd.f32 0.0, %v667
          %v669 = vpop.f32.mrb[0].mxu0
          %v670 = vadd.f32 0.0, %v669
          %671 = vmatprep.mubr.f32.mxu0 %v391
          %672 = vmatmul.mubr.f32.gmra.mrb[0].mxu0 %v390
          %v673 = vpop.f32.mrb[0].mxu0
          %v674 = vadd.f32 0.0, %v673
          %v675 = vpop.f32.mrb[0].mxu0
          %v676 = vadd.f32 0.0, %v675
          %677 = vdwg.mxu0
          %678 = vst [vmem:[#allocation3] sm:$0xff] %v668
          %679 = vst [vmem:[#allocation3 + $0x8] sm:$0xff] %v670
          %680 = vst [vmem:[#allocation3 + $0x10] sm:$0xff] %v674
          %681 = vst [vmem:[#allocation3 + $0x18] sm:$0xff] %v676
        $region72: #{tpu_custom_call.1} parent=43 // pred_fallthru
          _
        %v682 = vld [vmem:[%s325] sm:$0xff]
        %v683 = vld [vmem:[%s325 + $0x8] sm:$0xff]
        %v684 = vld [vmem:[#allocation10] sm:$0xff]
        %v685 = vld [vmem:[#allocation10 + $0x8] sm:$0xff]
        %v686 = vld [vmem:[#allocation10 + $0x10] sm:$0xff]
        %v687 = vld [vmem:[#allocation10 + $0x18] sm:$0xff]
        %v688 = vld [vmem:[#allocation10 + $0x20] sm:$0xff]
        %v689 = vld [vmem:[#allocation10 + $0x28] sm:$0xff]
        %v690 = vld [vmem:[#allocation10 + $0x30] sm:$0xff]
        %v691 = vld [vmem:[#allocation10 + $0x38] sm:$0xff]
        %v692 = vld [vmem:[#allocation10 + $0x40] sm:$0xff]
        %v693 = vld [vmem:[#allocation10 + $0x48] sm:$0xff]
        %v694 = vld [vmem:[#allocation10 + $0x50] sm:$0xff]
        %v695 = vld [vmem:[#allocation10 + $0x58] sm:$0xff]
        %v696 = vld [vmem:[#allocation10 + $0x60] sm:$0xff]
        %v697 = vld [vmem:[#allocation10 + $0x68] sm:$0xff]
        %v698 = vld [vmem:[#allocation10 + $0x70] sm:$0xff]
        %v699 = vld [vmem:[#allocation10 + $0x78] sm:$0xff]
        %v700 = vld [vmem:[#allocation10 + $0x80] sm:$0xff]
        %v701 = vld [vmem:[#allocation10 + $0x88] sm:$0xff]
        %v702 = vld [vmem:[#allocation10 + $0x90] sm:$0xff]
        %v703 = vld [vmem:[#allocation10 + $0x98] sm:$0xff]
        %v704 = vld [vmem:[#allocation10 + $0xa0] sm:$0xff]
        %v705 = vld [vmem:[#allocation10 + $0xa8] sm:$0xff]
        %v706 = vld [vmem:[#allocation10 + $0xb0] sm:$0xff]
        %v707 = vld [vmem:[#allocation10 + $0xb8] sm:$0xff]
        %v708 = vld [vmem:[#allocation10 + $0xc0] sm:$0xff]
        %v709 = vld [vmem:[#allocation10 + $0xc8] sm:$0xff]
        %v710 = vld [vmem:[#allocation10 + $0xd0] sm:$0xff]
        %v711 = vld [vmem:[#allocation10 + $0xd8] sm:$0xff]
        %v712 = vld [vmem:[#allocation10 + $0xe0] sm:$0xff]
        %v713 = vld [vmem:[#allocation10 + $0xe8] sm:$0xff]
        %v714 = vld [vmem:[#allocation10 + $0xf0] sm:$0xff]
        %v715 = vld [vmem:[#allocation10 + $0xf8] sm:$0xff]
        %v716 = vld [vmem:[#allocation10 + $0x100] sm:$0xff]
        %v717 = vld [vmem:[#allocation10 + $0x108] sm:$0xff]
        %v718 = vld [vmem:[#allocation10 + $0x110] sm:$0xff]
        %v719 = vld [vmem:[#allocation10 + $0x118] sm:$0xff]
        %v720 = vld [vmem:[#allocation10 + $0x120] sm:$0xff]
        %v721 = vld [vmem:[#allocation10 + $0x128] sm:$0xff]
        %v722 = vld [vmem:[#allocation10 + $0x130] sm:$0xff]
        %v723 = vld [vmem:[#allocation10 + $0x138] sm:$0xff]
        %v724 = vld [vmem:[#allocation10 + $0x140] sm:$0xff]
        %v725 = vld [vmem:[#allocation10 + $0x148] sm:$0xff]
        %v726 = vld [vmem:[#allocation10 + $0x150] sm:$0xff]
        %v727 = vld [vmem:[#allocation10 + $0x158] sm:$0xff]
        %v728 = vld [vmem:[#allocation10 + $0x160] sm:$0xff]
        %v729 = vld [vmem:[#allocation10 + $0x168] sm:$0xff]
        %v730 = vld [vmem:[#allocation10 + $0x170] sm:$0xff]
        %v731 = vld [vmem:[#allocation10 + $0x178] sm:$0xff]
        %v732 = vld [vmem:[#allocation10 + $0x180] sm:$0xff]
        %v733 = vld [vmem:[#allocation10 + $0x188] sm:$0xff]
        %v734 = vld [vmem:[#allocation10 + $0x190] sm:$0xff]
        %v735 = vld [vmem:[#allocation10 + $0x198] sm:$0xff]
        %v736 = vld [vmem:[#allocation10 + $0x1a0] sm:$0xff]
        %v737 = vld [vmem:[#allocation10 + $0x1a8] sm:$0xff]
        %v738 = vld [vmem:[#allocation10 + $0x1b0] sm:$0xff]
        %v739 = vld [vmem:[#allocation10 + $0x1b8] sm:$0xff]
        %v740 = vld [vmem:[#allocation10 + $0x1c0] sm:$0xff]
        %v741 = vld [vmem:[#allocation10 + $0x1c8] sm:$0xff]
        %v742 = vld [vmem:[#allocation10 + $0x1d0] sm:$0xff]
        %v743 = vld [vmem:[#allocation10 + $0x1d8] sm:$0xff]
        %v744 = vld [vmem:[#allocation10 + $0x1e0] sm:$0xff]
        %v745 = vld [vmem:[#allocation10 + $0x1e8] sm:$0xff]
        %v746 = vld [vmem:[#allocation10 + $0x1f0] sm:$0xff]
        %v747 = vld [vmem:[#allocation10 + $0x1f8] sm:$0xff]
        %748 = vmatprep.subr.mxu0 %v685
        %749 = vmatpush1.xpose.msra.mxu0 %v684
        %750 = vmatprep.subr.mxu0 %v687
        %751 = vmatpush1.xpose.msra.mxu0 %v686
        %752 = vmatprep.subr.mxu0 %v689
        %753 = vmatpush1.xpose.msra.mxu0 %v688
        %754 = vmatprep.subr.mxu0 %v691
        %755 = vmatpush1.xpose.msra.mxu0 %v690
        %756 = vmatprep.subr.mxu0 %v693
        %757 = vmatpush1.xpose.msra.mxu0 %v692
        %758 = vmatprep.subr.mxu0 %v695
        %759 = vmatpush1.xpose.msra.mxu0 %v694
        %760 = vmatprep.subr.mxu0 %v697
        %761 = vmatpush1.xpose.msra.mxu0 %v696
        %762 = vmatprep.subr.mxu0 %v699
        %763 = vmatpush1.xpose.msra.mxu0 %v698
        %764 = vmatprep.subr.mxu0 %v701
        %765 = vmatpush1.xpose.msra.mxu0 %v700
        %766 = vmatprep.subr.mxu0 %v703
        %767 = vmatpush1.xpose.msra.mxu0 %v702
        %768 = vmatprep.subr.mxu0 %v705
        %769 = vmatpush1.xpose.msra.mxu0 %v704
        %770 = vmatprep.subr.mxu0 %v707
        %771 = vmatpush1.xpose.msra.mxu0 %v706
        %772 = vmatprep.subr.mxu0 %v709
        %773 = vmatpush1.xpose.msra.mxu0 %v708
        %774 = vmatprep.subr.mxu0 %v711
        %775 = vmatpush1.xpose.msra.mxu0 %v710
        %776 = vmatprep.subr.mxu0 %v713
        %777 = vmatpush1.xpose.msra.mxu0 %v712
        %778 = vmatprep.subr.mxu0 %v715
        %779 = vmatpush1.xpose.msra.mxu0 %v714
        %780 = vmatprep.subr.mxu0 %v717
        %781 = vmatpush1.xpose.msra.mxu0 %v716
        %782 = vmatprep.subr.mxu0 %v719
        %783 = vmatpush1.xpose.msra.mxu0 %v718
        %784 = vmatprep.subr.mxu0 %v721
        %785 = vmatpush1.xpose.msra.mxu0 %v720
        %786 = vmatprep.subr.mxu0 %v723
        %787 = vmatpush1.xpose.msra.mxu0 %v722
        %788 = vmatprep.subr.mxu0 %v725
        %789 = vmatpush1.xpose.msra.mxu0 %v724
        %790 = vmatprep.subr.mxu0 %v727
        %791 = vmatpush1.xpose.msra.mxu0 %v726
        %792 = vmatprep.subr.mxu0 %v729
        %793 = vmatpush1.xpose.msra.mxu0 %v728
        %794 = vmatprep.subr.mxu0 %v731
        %795 = vmatpush1.xpose.msra.mxu0 %v730
        %796 = vmatprep.subr.mxu0 %v733
        %797 = vmatpush1.xpose.msra.mxu0 %v732
        %798 = vmatprep.subr.mxu0 %v735
        %799 = vmatpush1.xpose.msra.mxu0 %v734
        %800 = vmatprep.subr.mxu0 %v737
        %801 = vmatpush1.xpose.msra.mxu0 %v736
        %802 = vmatprep.subr.mxu0 %v739
        %803 = vmatpush1.xpose.msra.mxu0 %v738
        %804 = vmatprep.subr.mxu0 %v741
        %805 = vmatpush1.xpose.msra.mxu0 %v740
        %806 = vmatprep.subr.mxu0 %v743
        %807 = vmatpush1.xpose.msra.mxu0 %v742
        %808 = vmatprep.subr.mxu0 %v745
        %809 = vmatpush1.xpose.msra.mxu0 %v744
        %810 = vmatprep.subr.mxu0 %v747
        %811 = vmatpush1.xpose.msra.mxu0 %v746
        %812 = vmatprep.mubr.f32.mxu0 %v683
        %813 = vmatmul.mubr.f32.gmra.mrb[0].mxu0 %v682
        %v814 = vpop.f32.mrb[0].mxu0
        %v815 = vadd.f32 0.0, %v814
        %v816 = vpop.f32.mrb[0].mxu0
        %v817 = vadd.f32 0.0, %v816
        %818 = vdwg.mxu0
        %v819 = vmul.f32 %v815, 0.088388346
        %v820 = vmul.f32 %v817, 0.088388346
        %v821 = vld [vmem:[#allocation2] sm:$0xff]
        %v822 = vld [vmem:[#allocation2 + $0x10] sm:$0xff]
        %v823 = vld [vmem:[#allocation3] sm:$0xff]
        %v824 = vld [vmem:[#allocation3 + $0x10] sm:$0xff]
        %825 = vmatprep.subr.mxu0 0.0
        %826 = vmatpush1.xpose.msra.mxu0 %v821
        %827 = vmatprep.subr.mxu0 0.0
        %828 = vmatpush1.xpose.msra.mxu0 %v822
        %829 = vmatprep.subr.mxu0 0.0
        %830 = vmatpush1.xpose.msra.mxu0 0.0
        %831 = vmatprep.subr.mxu0 0.0
        %832 = vmatpush1.xpose.msra.mxu0 0.0
        %833 = vmatprep.subr.mxu0 0.0
        %834 = vmatpush1.xpose.msra.mxu0 0.0
        %835 = vmatprep.subr.mxu0 0.0
        %836 = vmatpush1.xpose.msra.mxu0 0.0
        %837 = vmatprep.subr.mxu0 0.0
        %838 = vmatpush1.xpose.msra.mxu0 0.0
        %839 = vmatprep.subr.mxu0 0.0
        %840 = vmatpush1.xpose.msra.mxu0 0.0
        %841 = vmatprep.subr.mxu0 0.0
        %842 = vmatpush1.xpose.msra.mxu0 0.0
        %843 = vmatprep.subr.mxu0 0.0
        %844 = vmatpush1.xpose.msra.mxu0 0.0
        %845 = vmatprep.subr.mxu0 0.0
        %846 = vmatpush1.xpose.msra.mxu0 0.0
        %847 = vmatprep.subr.mxu0 0.0
        %848 = vmatpush1.xpose.msra.mxu0 0.0
        %849 = vmatprep.subr.mxu0 0.0
        %850 = vmatpush1.xpose.msra.mxu0 0.0
        %851 = vmatprep.subr.mxu0 0.0
        %852 = vmatpush1.xpose.msra.mxu0 0.0
        %853 = vmatprep.subr.mxu0 0.0
        %854 = vmatpush1.xpose.msra.mxu0 0.0
        %855 = vmatprep.subr.mxu0 0.0
        %856 = vmatpush1.xpose.msra.mxu0 0.0
        %857 = vmatprep.subr.mxu0 0.0
        %858 = vmatpush1.xpose.msra.mxu0 0.0
        %859 = vmatprep.subr.mxu0 0.0
        %860 = vmatpush1.xpose.msra.mxu0 0.0
        %861 = vmatprep.subr.mxu0 0.0
        %862 = vmatpush1.xpose.msra.mxu0 0.0
        %863 = vmatprep.subr.mxu0 0.0
        %864 = vmatpush1.xpose.msra.mxu0 0.0
        %865 = vmatprep.subr.mxu0 0.0
        %866 = vmatpush1.xpose.msra.mxu0 0.0
        %867 = vmatprep.subr.mxu0 0.0
        %868 = vmatpush1.xpose.msra.mxu0 0.0
        %869 = vmatprep.subr.mxu0 0.0
        %870 = vmatpush1.xpose.msra.mxu0 0.0
        %871 = vmatprep.subr.mxu0 0.0
        %872 = vmatpush1.xpose.msra.mxu0 0.0
        %873 = vmatprep.subr.mxu0 0.0
        %874 = vmatpush1.xpose.msra.mxu0 0.0
        %875 = vmatprep.subr.mxu0 0.0
        %876 = vmatpush1.xpose.msra.mxu0 0.0
        %877 = vmatprep.subr.mxu0 0.0
        %878 = vmatpush1.xpose.msra.mxu0 0.0
        %879 = vmatprep.subr.mxu0 0.0
        %880 = vmatpush1.xpose.msra.mxu0 0.0
        %881 = vmatprep.subr.mxu0 0.0
        %882 = vmatpush1.xpose.msra.mxu0 0.0
        %883 = vmatprep.subr.mxu0 0.0
        %884 = vmatpush1.xpose.msra.mxu0 0.0
        %885 = vmatprep.subr.mxu0 0.0
        %886 = vmatpush1.xpose.msra.mxu0 0.0
        %887 = vmatprep.subr.mxu0 0.0
        %888 = vmatpush1.xpose.msra.mxu0 0.0
        %889 = vmatprep.mubr.f32.mxu0 0.0
        %890 = vmatmul.mubr.f32.gmra.mrb[0].mxu0 %v819
        %v891 = vpop.f32.mrb[0].mxu0
        %v892 = vadd.f32 0.0, %v891
        %v893 = vpop.f32.mrb[0].mxu0
        %894 = vdwg.mxu0
        %vm895 = vcmask 130048
        %v896 = vsel %vm895, %v892, -inf
        %897 = vmax.xlane.f32.xlu0 %v896
        %v898 = vpop.xlane.xlu0 %897
        %v899 = vsub.f32 %v892, %v898
        %v900 = vmul.f32 %v899, 1.442695
        %v901 = vpow.pop %v900
        %v902 = vsel %vm895, %v901, 0.0
        %903 = vadd.xlane.f32.xlu0 %v902
        %v904 = vpop.xlane.xlu0 %903
        %v905 = vrcp.pop %v904
        %v906 = vmul.f32 %v901, %v905
        %v908 = vsel %vm895, %v906, 0
        %910 = vmatprep.subr.mxu0 0.0
        %911 = vmatpush1.msra.mxu0 %v823
        %912 = vmatprep.subr.mxu0 0.0
        %913 = vmatpush1.msra.mxu0 %v824
        %914 = vmatprep.subr.mxu0 0.0
        %915 = vmatpush1.msra.mxu0 0.0
        %916 = vmatprep.subr.mxu0 0.0
        %917 = vmatpush1.msra.mxu0 0.0
        %918 = vmatprep.subr.mxu0 0.0
        %919 = vmatpush1.msra.mxu0 0.0
        %920 = vmatprep.subr.mxu0 0.0
        %921 = vmatpush1.msra.mxu0 0.0
        %922 = vmatprep.subr.mxu0 0.0
        %923 = vmatpush1.msra.mxu0 0.0
        %924 = vmatprep.subr.mxu0 0.0
        %925 = vmatpush1.msra.mxu0 0.0
        %926 = vmatprep.subr.mxu0 0.0
        %927 = vmatpush1.msra.mxu0 0.0
        %928 = vmatprep.subr.mxu0 0.0
        %929 = vmatpush1.msra.mxu0 0.0
        %930 = vmatprep.subr.mxu0 0.0
        %931 = vmatpush1.msra.mxu0 0.0
        %932 = vmatprep.subr.mxu0 0.0
        %933 = vmatpush1.msra.mxu0 0.0
        %934 = vmatprep.subr.mxu0 0.0
        %935 = vmatpush1.msra.mxu0 0.0
        %936 = vmatprep.subr.mxu0 0.0
        %937 = vmatpush1.msra.mxu0 0.0
        %938 = vmatprep.subr.mxu0 0.0
        %939 = vmatpush1.msra.mxu0 0.0
        %940 = vmatprep.subr.mxu0 0.0
        %941 = vmatpush1.msra.mxu0 0.0
        %942 = vmatprep.subr.mxu0 0.0
        %943 = vmatpush1.msra.mxu0 0.0
        %944 = vmatprep.subr.mxu0 0.0
        %945 = vmatpush1.msra.mxu0 0.0
        %946 = vmatprep.subr.mxu0 0.0
        %947 = vmatpush1.msra.mxu0 0.0
        %948 = vmatprep.subr.mxu0 0.0
        %949 = vmatpush1.msra.mxu0 0.0
        %950 = vmatprep.subr.mxu0 0.0
        %951 = vmatpush1.msra.mxu0 0.0
        %952 = vmatprep.subr.mxu0 0.0
        %953 = vmatpush1.msra.mxu0 0.0
        %954 = vmatprep.subr.mxu0 0.0
        %955 = vmatpush1.msra.mxu0 0.0
        %956 = vmatprep.subr.mxu0 0.0
        %957 = vmatpush1.msra.mxu0 0.0
        %958 = vmatprep.subr.mxu0 0.0
        %959 = vmatpush1.msra.mxu0 0.0
        %960 = vmatprep.subr.mxu0 0.0
        %961 = vmatpush1.msra.mxu0 0.0
        %962 = vmatprep.subr.mxu0 0.0
        %963 = vmatpush1.msra.mxu0 0.0
        %964 = vmatprep.subr.mxu0 0.0
        %965 = vmatpush1.msra.mxu0 0.0
        %966 = vmatprep.subr.mxu0 0.0
        %967 = vmatpush1.msra.mxu0 0.0
        %968 = vmatprep.subr.mxu0 0.0
        %969 = vmatpush1.msra.mxu0 0.0
        %970 = vmatprep.subr.mxu0 0.0
        %971 = vmatpush1.msra.mxu0 0.0
        %972 = vmatprep.subr.mxu0 0.0
        %973 = vmatpush1.msra.mxu0 0.0
        %974 = vmatprep.mubr.f32.mxu0 0.0
        %975 = vmatmul.mubr.f32.gmra.mrb[0].mxu0 %v908
        %v976 = vpop.f32.mrb[0].mxu0
        %v977 = vadd.f32 0.0, %v976
        %v978 = vpop.f32.mrb[0].mxu0
        %979 = vdwg.mxu0
        %980 = vst [vmem:[#allocation4] sm:$0xff] %v977
        %v981 = vld [vmem:[#allocation2 + $0x8] sm:$0xff]
        %v982 = vld [vmem:[#allocation2 + $0x18] sm:$0xff]
        %v983 = vld [vmem:[#allocation3 + $0x8] sm:$0xff]
        %v984 = vld [vmem:[#allocation3 + $0x18] sm:$0xff]
        %985 = vmatprep.subr.mxu0 0.0
        %986 = vmatpush1.xpose.msra.mxu0 %v981
        %987 = vmatprep.subr.mxu0 0.0
        %988 = vmatpush1.xpose.msra.mxu0 %v982
        %989 = vmatprep.subr.mxu0 0.0
        %990 = vmatpush1.xpose.msra.mxu0 0.0
        %991 = vmatprep.subr.mxu0 0.0
        %992 = vmatpush1.xpose.msra.mxu0 0.0
        %993 = vmatprep.subr.mxu0 0.0
        %994 = vmatpush1.xpose.msra.mxu0 0.0
        %995 = vmatprep.subr.mxu0 0.0
        %996 = vmatpush1.xpose.msra.mxu0 0.0
        %997 = vmatprep.subr.mxu0 0.0
        %998 = vmatpush1.xpose.msra.mxu0 0.0
        %999 = vmatprep.subr.mxu0 0.0
        %1000 = vmatpush1.xpose.msra.mxu0 0.0
        %1001 = vmatprep.subr.mxu0 0.0
        %1002 = vmatpush1.xpose.msra.mxu0 0.0
        %1003 = vmatprep.subr.mxu0 0.0
        %1004 = vmatpush1.xpose.msra.mxu0 0.0
        %1005 = vmatprep.subr.mxu0 0.0
        %1006 = vmatpush1.xpose.msra.mxu0 0.0
        %1007 = vmatprep.subr.mxu0 0.0
        %1008 = vmatpush1.xpose.msra.mxu0 0.0
        %1009 = vmatprep.subr.mxu0 0.0
        %1010 = vmatpush1.xpose.msra.mxu0 0.0
        %1011 = vmatprep.subr.mxu0 0.0
        %1012 = vmatpush1.xpose.msra.mxu0 0.0
        %1013 = vmatprep.subr.mxu0 0.0
        %1014 = vmatpush1.xpose.msra.mxu0 0.0
        %1015 = vmatprep.subr.mxu0 0.0
        %1016 = vmatpush1.xpose.msra.mxu0 0.0
        %1017 = vmatprep.subr.mxu0 0.0
        %1018 = vmatpush1.xpose.msra.mxu0 0.0
        %1019 = vmatprep.subr.mxu0 0.0
        %1020 = vmatpush1.xpose.msra.mxu0 0.0
        %1021 = vmatprep.subr.mxu0 0.0
        %1022 = vmatpush1.xpose.msra.mxu0 0.0
        %1023 = vmatprep.subr.mxu0 0.0
        %1024 = vmatpush1.xpose.msra.mxu0 0.0
        %1025 = vmatprep.subr.mxu0 0.0
        %1026 = vmatpush1.xpose.msra.mxu0 0.0
        %1027 = vmatprep.subr.mxu0 0.0
        %1028 = vmatpush1.xpose.msra.mxu0 0.0
        %1029 = vmatprep.subr.mxu0 0.0
        %1030 = vmatpush1.xpose.msra.mxu0 0.0
        %1031 = vmatprep.subr.mxu0 0.0
        %1032 = vmatpush1.xpose.msra.mxu0 0.0
        %1033 = vmatprep.subr.mxu0 0.0
        %1034 = vmatpush1.xpose.msra.mxu0 0.0
        %1035 = vmatprep.subr.mxu0 0.0
        %1036 = vmatpush1.xpose.msra.mxu0 0.0
        %1037 = vmatprep.subr.mxu0 0.0
        %1038 = vmatpush1.xpose.msra.mxu0 0.0
        %1039 = vmatprep.subr.mxu0 0.0
        %1040 = vmatpush1.xpose.msra.mxu0 0.0
        %1041 = vmatprep.subr.mxu0 0.0
        %1042 = vmatpush1.xpose.msra.mxu0 0.0
        %1043 = vmatprep.subr.mxu0 0.0
        %1044 = vmatpush1.xpose.msra.mxu0 0.0
        %1045 = vmatprep.subr.mxu0 0.0
        %1046 = vmatpush1.xpose.msra.mxu0 0.0
        %1047 = vmatprep.subr.mxu0 0.0
        %1048 = vmatpush1.xpose.msra.mxu0 0.0
        %1049 = vmatprep.mubr.f32.mxu0 0.0
        %1050 = vmatmul.mubr.f32.gmra.mrb[0].mxu0 %v820
        %v1051 = vpop.f32.mrb[0].mxu0
        %v1052 = vadd.f32 0.0, %v1051
        %v1053 = vpop.f32.mrb[0].mxu0
        %1054 = vdwg.mxu0
        %v1055 = vsel %vm895, %v1052, -inf
        %1056 = vmax.xlane.f32.xlu0 %v1055
        %v1057 = vpop.xlane.xlu0 %1056
        %v1058 = vsub.f32 %v1052, %v1057
        %v1059 = vmul.f32 %v1058, 1.442695
        %v1060 = vpow.pop %v1059
        %v1061 = vsel %vm895, %v1060, 0.0
        %1062 = vadd.xlane.f32.xlu0 %v1061
        %v1063 = vpop.xlane.xlu0 %1062
        %v1064 = vrcp.pop %v1063
        %v1065 = vmul.f32 %v1060, %v1064
        %v1067 = vsel %vm895, %v1065, 0
        %1069 = vmatprep.subr.mxu0 0.0
        %1070 = vmatpush1.msra.mxu0 %v983
        %1071 = vmatprep.subr.mxu0 0.0
        %1072 = vmatpush1.msra.mxu0 %v984
        %1073 = vmatprep.subr.mxu0 0.0
        %1074 = vmatpush1.msra.mxu0 0.0
        %1075 = vmatprep.subr.mxu0 0.0
        %1076 = vmatpush1.msra.mxu0 0.0
        %1077 = vmatprep.subr.mxu0 0.0
        %1078 = vmatpush1.msra.mxu0 0.0
        %1079 = vmatprep.subr.mxu0 0.0
        %1080 = vmatpush1.msra.mxu0 0.0
        %1081 = vmatprep.subr.mxu0 0.0
        %1082 = vmatpush1.msra.mxu0 0.0
        %1083 = vmatprep.subr.mxu0 0.0
        %1084 = vmatpush1.msra.mxu0 0.0
        %1085 = vmatprep.subr.mxu0 0.0
        %1086 = vmatpush1.msra.mxu0 0.0
        %1087 = vmatprep.subr.mxu0 0.0
        %1088 = vmatpush1.msra.mxu0 0.0
        %1089 = vmatprep.subr.mxu0 0.0
        %1090 = vmatpush1.msra.mxu0 0.0
        %1091 = vmatprep.subr.mxu0 0.0
        %1092 = vmatpush1.msra.mxu0 0.0
        %1093 = vmatprep.subr.mxu0 0.0
        %1094 = vmatpush1.msra.mxu0 0.0
        %1095 = vmatprep.subr.mxu0 0.0
        %1096 = vmatpush1.msra.mxu0 0.0
        %1097 = vmatprep.subr.mxu0 0.0
        %1098 = vmatpush1.msra.mxu0 0.0
        %1099 = vmatprep.subr.mxu0 0.0
        %1100 = vmatpush1.msra.mxu0 0.0
        %1101 = vmatprep.subr.mxu0 0.0
        %1102 = vmatpush1.msra.mxu0 0.0
        %1103 = vmatprep.subr.mxu0 0.0
        %1104 = vmatpush1.msra.mxu0 0.0
        %1105 = vmatprep.subr.mxu0 0.0
        %1106 = vmatpush1.msra.mxu0 0.0
        %1107 = vmatprep.subr.mxu0 0.0
        %1108 = vmatpush1.msra.mxu0 0.0
        %1109 = vmatprep.subr.mxu0 0.0
        %1110 = vmatpush1.msra.mxu0 0.0
        %1111 = vmatprep.subr.mxu0 0.0
        %1112 = vmatpush1.msra.mxu0 0.0
        %1113 = vmatprep.subr.mxu0 0.0
        %1114 = vmatpush1.msra.mxu0 0.0
        %1115 = vmatprep.subr.mxu0 0.0
        %1116 = vmatpush1.msra.mxu0 0.0
        %1117 = vmatprep.subr.mxu0 0.0
        %1118 = vmatpush1.msra.mxu0 0.0
        %1119 = vmatprep.subr.mxu0 0.0
        %1120 = vmatpush1.msra.mxu0 0.0
        %1121 = vmatprep.subr.mxu0 0.0
        %1122 = vmatpush1.msra.mxu0 0.0
        %1123 = vmatprep.subr.mxu0 0.0
        %1124 = vmatpush1.msra.mxu0 0.0
        %1125 = vmatprep.subr.mxu0 0.0
        %1126 = vmatpush1.msra.mxu0 0.0
        %1127 = vmatprep.subr.mxu0 0.0
        %1128 = vmatpush1.msra.mxu0 0.0
        %1129 = vmatprep.subr.mxu0 0.0
        %1130 = vmatpush1.msra.mxu0 0.0
        %1131 = vmatprep.subr.mxu0 0.0
        %1132 = vmatpush1.msra.mxu0 0.0
        %1133 = vmatprep.mubr.f32.mxu0 0.0
        %1134 = vmatmul.mubr.f32.gmra.mrb[0].mxu0 %v1067
        %v1135 = vpop.f32.mrb[0].mxu0
        %v1136 = vadd.f32 0.0, %v1135
        %v1137 = vpop.f32.mrb[0].mxu0
        %1138 = vdwg.mxu0
        %1139 = vst [vmem:[#allocation4 + $0x8] sm:$0xff] %v1136
        %v1140 = vld [vmem:[#allocation4] sm:$0xff]
        %v1141 = vld [vmem:[#allocation4 + $0x8] sm:$0xff]
        %v1142 = vld [vmem:[#allocation14] sm:$0xff]
        %v1143 = vld [vmem:[#allocation14 + $0x8] sm:$0xff]
        %v1144 = vld [vmem:[#allocation14 + $0x10] sm:$0xff]
        %v1145 = vld [vmem:[#allocation14 + $0x18] sm:$0xff]
        %v1146 = vld [vmem:[#allocation14 + $0x20] sm:$0xff]
        %v1147 = vld [vmem:[#allocation14 + $0x28] sm:$0xff]
        %v1148 = vld [vmem:[#allocation14 + $0x30] sm:$0xff]
        %v1149 = vld [vmem:[#allocation14 + $0x38] sm:$0xff]
        %v1150 = vld [vmem:[#allocation14 + $0x40] sm:$0xff]
        %v1151 = vld [vmem:[#allocation14 + $0x48] sm:$0xff]
        %v1152 = vld [vmem:[#allocation14 + $0x50] sm:$0xff]
        %v1153 = vld [vmem:[#allocation14 + $0x58] sm:$0xff]
        %v1154 = vld [vmem:[#allocation14 + $0x60] sm:$0xff]
        %v1155 = vld [vmem:[#allocation14 + $0x68] sm:$0xff]
        %v1156 = vld [vmem:[#allocation14 + $0x70] sm:$0xff]
        %v1157 = vld [vmem:[#allocation14 + $0x78] sm:$0xff]
        %v1158 = vld [vmem:[#allocation14 + $0x80] sm:$0xff]
        %v1159 = vld [vmem:[#allocation14 + $0x88] sm:$0xff]
        %v1160 = vld [vmem:[#allocation14 + $0x90] sm:$0xff]
        %v1161 = vld [vmem:[#allocation14 + $0x98] sm:$0xff]
        %v1162 = vld [vmem:[#allocation14 + $0xa0] sm:$0xff]
        %v1163 = vld [vmem:[#allocation14 + $0xa8] sm:$0xff]
        %v1164 = vld [vmem:[#allocation14 + $0xb0] sm:$0xff]
        %v1165 = vld [vmem:[#allocation14 + $0xb8] sm:$0xff]
        %v1166 = vld [vmem:[#allocation14 + $0xc0] sm:$0xff]
        %v1167 = vld [vmem:[#allocation14 + $0xc8] sm:$0xff]
        %v1168 = vld [vmem:[#allocation14 + $0xd0] sm:$0xff]
        %v1169 = vld [vmem:[#allocation14 + $0xd8] sm:$0xff]
        %v1170 = vld [vmem:[#allocation14 + $0xe0] sm:$0xff]
        %v1171 = vld [vmem:[#allocation14 + $0xe8] sm:$0xff]
        %v1172 = vld [vmem:[#allocation14 + $0xf0] sm:$0xff]
        %v1173 = vld [vmem:[#allocation14 + $0xf8] sm:$0xff]
        %v1174 = vld [vmem:[#allocation14 + $0x100] sm:$0xff]
        %v1175 = vld [vmem:[#allocation14 + $0x108] sm:$0xff]
        %v1176 = vld [vmem:[#allocation14 + $0x110] sm:$0xff]
        %v1177 = vld [vmem:[#allocation14 + $0x118] sm:$0xff]
        %v1178 = vld [vmem:[#allocation14 + $0x120] sm:$0xff]
        %v1179 = vld [vmem:[#allocation14 + $0x128] sm:$0xff]
        %v1180 = vld [vmem:[#allocation14 + $0x130] sm:$0xff]
        %v1181 = vld [vmem:[#allocation14 + $0x138] sm:$0xff]
        %v1182 = vld [vmem:[#allocation14 + $0x140] sm:$0xff]
        %v1183 = vld [vmem:[#allocation14 + $0x148] sm:$0xff]
        %v1184 = vld [vmem:[#allocation14 + $0x150] sm:$0xff]
        %v1185 = vld [vmem:[#allocation14 + $0x158] sm:$0xff]
        %v1186 = vld [vmem:[#allocation14 + $0x160] sm:$0xff]
        %v1187 = vld [vmem:[#allocation14 + $0x168] sm:$0xff]
        %v1188 = vld [vmem:[#allocation14 + $0x170] sm:$0xff]
        %v1189 = vld [vmem:[#allocation14 + $0x178] sm:$0xff]
        %v1190 = vld [vmem:[#allocation14 + $0x180] sm:$0xff]
        %v1191 = vld [vmem:[#allocation14 + $0x188] sm:$0xff]
        %v1192 = vld [vmem:[#allocation14 + $0x190] sm:$0xff]
        %v1193 = vld [vmem:[#allocation14 + $0x198] sm:$0xff]
        %v1194 = vld [vmem:[#allocation14 + $0x1a0] sm:$0xff]
        %v1195 = vld [vmem:[#allocation14 + $0x1a8] sm:$0xff]
        %v1196 = vld [vmem:[#allocation14 + $0x1b0] sm:$0xff]
        %v1197 = vld [vmem:[#allocation14 + $0x1b8] sm:$0xff]
        %v1198 = vld [vmem:[#allocation14 + $0x1c0] sm:$0xff]
        %v1199 = vld [vmem:[#allocation14 + $0x1c8] sm:$0xff]
        %v1200 = vld [vmem:[#allocation14 + $0x1d0] sm:$0xff]
        %v1201 = vld [vmem:[#allocation14 + $0x1d8] sm:$0xff]
        %v1202 = vld [vmem:[#allocation14 + $0x1e0] sm:$0xff]
        %v1203 = vld [vmem:[#allocation14 + $0x1e8] sm:$0xff]
        %v1204 = vld [vmem:[#allocation14 + $0x1f0] sm:$0xff]
        %v1205 = vld [vmem:[#allocation14 + $0x1f8] sm:$0xff]
        %1206 = vmatprep.subr.mxu0 %v1143
        %1207 = vmatpush1.xpose.msra.mxu0 %v1142
        %1208 = vmatprep.subr.mxu0 %v1145
        %1209 = vmatpush1.xpose.msra.mxu0 %v1144
        %1210 = vmatprep.subr.mxu0 %v1147
        %1211 = vmatpush1.xpose.msra.mxu0 %v1146
        %1212 = vmatprep.subr.mxu0 %v1149
        %1213 = vmatpush1.xpose.msra.mxu0 %v1148
        %1214 = vmatprep.subr.mxu0 %v1151
        %1215 = vmatpush1.xpose.msra.mxu0 %v1150
        %1216 = vmatprep.subr.mxu0 %v1153
        %1217 = vmatpush1.xpose.msra.mxu0 %v1152
        %1218 = vmatprep.subr.mxu0 %v1155
        %1219 = vmatpush1.xpose.msra.mxu0 %v1154
        %1220 = vmatprep.subr.mxu0 %v1157
        %1221 = vmatpush1.xpose.msra.mxu0 %v1156
        %1222 = vmatprep.subr.mxu0 %v1159
        %1223 = vmatpush1.xpose.msra.mxu0 %v1158
        %1224 = vmatprep.subr.mxu0 %v1161
        %1225 = vmatpush1.xpose.msra.mxu0 %v1160
        %1226 = vmatprep.subr.mxu0 %v1163
        %1227 = vmatpush1.xpose.msra.mxu0 %v1162
        %1228 = vmatprep.subr.mxu0 %v1165
        %1229 = vmatpush1.xpose.msra.mxu0 %v1164
        %1230 = vmatprep.subr.mxu0 %v1167
        %1231 = vmatpush1.xpose.msra.mxu0 %v1166
        %1232 = vmatprep.subr.mxu0 %v1169
        %1233 = vmatpush1.xpose.msra.mxu0 %v1168
        %1234 = vmatprep.subr.mxu0 %v1171
        %1235 = vmatpush1.xpose.msra.mxu0 %v1170
        %1236 = vmatprep.subr.mxu0 %v1173
        %1237 = vmatpush1.xpose.msra.mxu0 %v1172
        %1238 = vmatprep.subr.mxu0 %v1175
        %1239 = vmatpush1.xpose.msra.mxu0 %v1174
        %1240 = vmatprep.subr.mxu0 %v1177
        %1241 = vmatpush1.xpose.msra.mxu0 %v1176
        %1242 = vmatprep.subr.mxu0 %v1179
        %1243 = vmatpush1.xpose.msra.mxu0 %v1178
        %1244 = vmatprep.subr.mxu0 %v1181
        %1245 = vmatpush1.xpose.msra.mxu0 %v1180
        %1246 = vmatprep.subr.mxu0 %v1183
        %1247 = vmatpush1.xpose.msra.mxu0 %v1182
        %1248 = vmatprep.subr.mxu0 %v1185
        %1249 = vmatpush1.xpose.msra.mxu0 %v1184
        %1250 = vmatprep.subr.mxu0 %v1187
        %1251 = vmatpush1.xpose.msra.mxu0 %v1186
        %1252 = vmatprep.subr.mxu0 %v1189
        %1253 = vmatpush1.xpose.msra.mxu0 %v1188
        %1254 = vmatprep.subr.mxu0 %v1191
        %1255 = vmatpush1.xpose.msra.mxu0 %v1190
        %1256 = vmatprep.subr.mxu0 %v1193
        %1257 = vmatpush1.xpose.msra.mxu0 %v1192
        %1258 = vmatprep.subr.mxu0 %v1195
        %1259 = vmatpush1.xpose.msra.mxu0 %v1194
        %1260 = vmatprep.subr.mxu0 %v1197
        %1261 = vmatpush1.xpose.msra.mxu0 %v1196
        %1262 = vmatprep.subr.mxu0 %v1199
        %1263 = vmatpush1.xpose.msra.mxu0 %v1198
        %1264 = vmatprep.subr.mxu0 %v1201
        %1265 = vmatpush1.xpose.msra.mxu0 %v1200
        %1266 = vmatprep.subr.mxu0 %v1203
        %1267 = vmatpush1.xpose.msra.mxu0 %v1202
        %1268 = vmatprep.subr.mxu0 %v1205
        %1269 = vmatpush1.xpose.msra.mxu0 %v1204
        %1270 = vmatprep.mubr.f32.mxu0 %v1141
        %1271 = vmatmul.mubr.f32.gmra.mrb[0].mxu0 %v1140
        %v1272 = vpop.f32.mrb[0].mxu0
        %v1273 = vadd.f32 0.0, %v1272
        %v1274 = vpop.f32.mrb[0].mxu0
        %v1275 = vadd.f32 0.0, %v1274
        %1276 = vdwg.mxu0
        %1277 = vst [vmem:[%s383] sm:$0xff] %v1273
        %1278 = vst [vmem:[%s383 + $0x8] sm:$0xff] %v1275
        %s1279 = sand.u32 %s188, 1
        %s1280 = scalar_lea.sflag [#allocation7], %s1279
        %s1281 = sand.u32 %s188, 1
        %s1282 = smul.addr %s1281, 16
        %s1283 = scalar_lea.vmem [#allocation16], %s1282
        // Predicated region
        $region73: #{tpu_custom_call.1} parent=43 // pred_check
          %p1284 = pneg %p198
        $region74: #{tpu_custom_call.1} parent=43 // pred_check_branch
          %1286 = sbr.rel (%p1284) target = $region76
        $region75: #{tpu_custom_call.1} parent=43 // pred_region
          %s1288 = ssub.s32 256, 256
          %1289 = vsyncadd %s1280, %s1288
          %s1290 = smul.addr %s33, 2
          %s1291 = smul.addr %s32, 4
          %s1292 = sadd.s32 %s1290, %s1291
          %s1293 = smul.addr %s1292, 128
          %s1294 = scalar_lea.hbm %s6, %s1293
          %s1296 = sshll.u32 %s1283, 4
          %s1297 = int_to_ptr.vmem [resolvable:$true] %s1296
          %1299 = dma.vmem_to_hbm [thread:$0]  %s1297, 256, %s1294, %s1280
        $region76: #{tpu_custom_call.1} parent=43 // pred_fallthru
          _
      $region44: #{tpu_custom_call.1} parent=5 // pred_fallthru
        _
      %p1300 = scmp.le.s32.totalorder 2, %s23
      // Predicated region
      $region77: #{tpu_custom_call.1} parent=5 // pred_check
        %p1301 = pneg %p1300
      $region78: #{tpu_custom_call.1} parent=5 // pred_check_branch
        %1303 = sbr.rel (%p1301) target = $region80
      $region79: #{tpu_custom_call.1} parent=5 // pred_region
        %s1304 = ssub.s32 %s23, 2
        // Predicated region
        $region81: #{tpu_custom_call.1} parent=79 // pred_check
          %p1305 = pneg %p204
        $region82: #{tpu_custom_call.1} parent=79 // pred_check_branch
          %1307 = sbr.rel (%p1305) target = $region84
        $region83: #{tpu_custom_call.1} parent=79 // pred_region
          %s1308 = sand.u32 %s189, 1
          %s1309 = scalar_lea.sflag [#allocation7], %s1308
          %s1310 = sand.u32 %s189, 1
          %s1311 = smul.addr %s1310, 16
          %s1312 = scalar_lea.vmem [#allocation16], %s1311
          %1313 = dma.done %s1309, 256
        $region84: #{tpu_custom_call.1} parent=79 // pred_fallthru
          _
      $region80: #{tpu_custom_call.1} parent=5 // pred_fallthru
        _
    $region6: #{tpu_custom_call.1} parent=1 // loop_footer
      %s27 = sadd.s32 1, %s23
    $region7: #{tpu_custom_call.1} parent=1 // loop_footer_branch
      %22 = sbr.rel target = $region3
    $region8: #{tpu_custom_call.1} parent=1 // loop_exit
      _
    %1314 = vsyncpa [#allocation6], 1
    %s1315 = scalar_lea.sflag [#allocation6], 1
    %1316 = vsyncpa %s1315, 1
    %1317 = vsyncpa [#allocation9], 1
    %s1318 = scalar_lea.sflag [#allocation9], 1
    %1319 = vsyncpa %s1318, 1
    %1320 = vsyncpa [#allocation12], 1
    %1321 = vsyncpa [#allocation15], 1
    %1322 = vsyncpa [#allocation7], 1
    %s1323 = scalar_lea.sflag [#allocation7], 1
    %1324 = vsyncpa %s1323, 1

</llo_original>
